<compile_context>
chip_gen: v7x
topology: tpu7x:2x2x1
jax: 0.10.0
libtpu: 0.0.40
codegen_flags: <defaults>
</compile_context>

<pallas_src>
import functools

import jax
import jax.numpy as jnp
from jax import lax
from jax.experimental import pallas as pl
from jax.experimental.pallas import tpu as pltpu

K = 5          # kernel_size
PAD = 2        # padding
EPS = 1e-5     # BatchNorm2d default eps


def _conv_stats_kernel(x_ref, w_ref, b_ref, conv_ref, sum_ref, ssq_ref,
                       xpad_ref, slab_ref, *, H, W, Cin, Cp):
    """Per-image conv (im2col + single MXU matmul) with fused BN partial stats.

    x_ref   : (1, Cin, H*W)  f32 input block (NCHW, spatial flattened)
    w_ref   : (Cout, KC)     bf16 weight matrix, rows ordered (kh, kw, c) with c
                             padded to Cp (mult of 8), KC padded to mult of 128
    b_ref   : (Cout, 1)      f32 conv bias
    conv_ref: (1, Cout, H*W) f32 conv output block (lane-dense)
    sum_ref : (1, Cout, 1)   f32 per-image per-channel sum
    ssq_ref : (1, Cout, 1)   f32 per-image per-channel sum of squares
    xpad_ref: (Cin, XLEN)    f32 scratch: flattened zero-padded image
    slab_ref: (KC, S)        f32 scratch: im2col slab, S = H * (W + 2*PAD)
    """
    WPP = W + 2 * PAD                     # padded row width
    S = slab_ref.shape[1]

    # ---- in-kernel zero padding (no padded activation copy in HBM) ----------------
    xpad_ref[...] = jnp.zeros_like(xpad_ref)
    slab_ref[...] = jnp.zeros_like(slab_ref)   # contraction-pad rows stay exactly 0

    # copy the image interior into the flattened padded buffer, one row at a time
    for i in range(H):
        col0 = (i + PAD) * WPP + PAD
        xpad_ref[:, col0:col0 + W] = x_ref[0, :, i * W:(i + 1) * W]

    # ---- build the im2col slab: each tap is ONE contiguous lane-shifted slice -----
    # slab row (kh*K + kw)*Cp + c  <-  xpad_flat[c, kh*WPP + kw : ... + S]
    # (tap blocks start at multiples of Cp, i.e. sublane-aligned stores)
    for kh in range(K):
        for kw in range(K):
            t = kh * K + kw
            off = kh * WPP + kw
            slab_ref[t * Cp:t * Cp + Cin, :] = xpad_ref[:, off:off + S]

    # ---- single MXU matmul, bf16 operands, f32 accumulation -----------------------
    out = jnp.dot(w_ref[...],                                  # (Cout, KC) bf16
                  slab_ref[...].astype(jnp.bfloat16),          # (KC, S)    bf16
                  preferred_element_type=jnp.float32)          # (Cout, S)  f32
    out = out + b_ref[...]                                     # conv bias broadcast

    # ---- drop the WPP-W junk columns of each padded row -> lane-dense (Cout, H*W) -
    for i in range(H):
        conv_ref[0, :, i * W:(i + 1) * W] = out[:, i * WPP:i * WPP + W]

    # ---- fused BN statistics epilogue (lane reductions over the resident tile) ----
    valid = conv_ref[0]                                        # (Cout, H*W) f32
    sum_ref[0] = jnp.sum(valid, axis=-1, keepdims=True)
    ssq_ref[0] = jnp.sum(valid * valid, axis=-1, keepdims=True)


def _bn_relu_kernel(conv_ref, sum_ref, ssq_ref, gamma_ref, beta_ref, o_ref, *,
                    inv_count):
    """Combine batch stats (tiny) + normalize + affine + ReLU, all lane-dense."""
    mean = jnp.sum(sum_ref[...], axis=0) * inv_count           # (Cout, 1)
    ex2 = jnp.sum(ssq_ref[...], axis=0) * inv_count
    # biased variance (train-mode BN); clamp guards E[x^2]-E[x]^2 cancellation
    var = jnp.maximum(ex2 - mean * mean, 0.0)
    inv = lax.rsqrt(var + EPS)                                 # EUP
    scale = gamma_ref[...] * inv                               # (Cout, 1)
    shift = beta_ref[...] - mean * scale
    y = conv_ref[0] * scale + shift                            # (Cout, H*W)
    o_ref[0] = jnp.maximum(y, 0.0).astype(o_ref.dtype)


@jax.jit
def cbn2d(x_nchw, w_oihw, bias, gamma, beta):
    """CBN2d forward (train-mode BatchNorm statistics), NCHW in / NCHW out."""
    N, Cin, H, W = x_nchw.shape
    Cout = w_oihw.shape[0]
    HW = H * W
    WPP = W + 2 * PAD
    S = H * WPP                                   # padded-row spatial extent
    Cp = ((Cin + 7) // 8) * 8                     # channel block, sublane-aligned
    KCU = K * K * Cp                              # used contraction rows
    KC = ((KCU + 127) // 128) * 128               # padded to MXU tile (128)
    XLEN = (H + 2 * PAD) * WPP + (K - 1)          # flattened padded image length

    # free reshapes / tiny parameter prep (no activation data movement)
    x2 = x_nchw.reshape(N, Cin, HW).astype(jnp.float32)
    w_t = jnp.transpose(w_oihw.astype(jnp.float32), (0, 2, 3, 1))   # (Cout,K,K,Cin)
    w_t = jnp.pad(w_t, ((0, 0), (0, 0), (0, 0), (0, Cp - Cin)))     # pad channels
    w_mat = w_t.reshape(Cout, KCU)
    w_mat = jnp.pad(w_mat, ((0, 0), (0, KC - KCU))).astype(jnp.bfloat16)
    b2 = bias.reshape(Cout, 1).astype(jnp.float32)
    gamma2 = gamma.reshape(Cout, 1).astype(jnp.float32)
    beta2 = beta.reshape(Cout, 1).astype(jnp.float32)

    conv_kernel = functools.partial(_conv_stats_kernel, H=H, W=W, Cin=Cin, Cp=Cp)

    conv_flat, sums, ssqs = pl.pallas_call(
        conv_kernel,
        grid=(N,),
        in_specs=[
            pl.BlockSpec((1, Cin, HW), lambda n: (n, 0, 0)),
            pl.BlockSpec((Cout, KC), lambda n: (0, 0)),
            pl.BlockSpec((Cout, 1), lambda n: (0, 0)),
        ],
        out_specs=(
            pl.BlockSpec((1, Cout, HW), lambda n: (n, 0, 0)),
            pl.BlockSpec((1, Cout, 1), lambda n: (n, 0, 0)),
            pl.BlockSpec((1, Cout, 1), lambda n: (n, 0, 0)),
        ),
        out_shape=(
            jax.ShapeDtypeStruct((N, Cout, HW), jnp.float32),
            jax.ShapeDtypeStruct((N, Cout, 1), jnp.float32),
            jax.ShapeDtypeStruct((N, Cout, 1), jnp.float32),
        ),
        scratch_shapes=[
            pltpu.VMEM((Cin, XLEN), jnp.float32),
            pltpu.VMEM((KC, S), jnp.float32),
        ],
        compiler_params=pltpu.CompilerParams(
            dimension_semantics=("parallel",)),      # batch axis -> megacore
    )(x2, w_mat, b2)

    bn_kernel = functools.partial(_bn_relu_kernel, inv_count=1.0 / float(N * HW))

    out_flat = pl.pallas_call(
        bn_kernel,
        grid=(N,),
        in_specs=[
            pl.BlockSpec((1, Cout, HW), lambda n: (n, 0, 0)),
            pl.BlockSpec((N, Cout, 1), lambda n: (0, 0, 0)),
            pl.BlockSpec((N, Cout, 1), lambda n: (0, 0, 0)),
            pl.BlockSpec((Cout, 1), lambda n: (0, 0)),
            pl.BlockSpec((Cout, 1), lambda n: (0, 0)),
        ],
        out_specs=pl.BlockSpec((1, Cout, HW), lambda n: (n, 0, 0)),
        out_shape=jax.ShapeDtypeStruct((N, Cout, HW), x_nchw.dtype),
        compiler_params=pltpu.CompilerParams(
            dimension_semantics=("parallel",)),
    )(conv_flat, sums, ssqs, gamma2, beta2)

    return out_flat.reshape(N, Cout, H, W)                      # free (no transpose)


def cbn2d_ref(x_nchw, w_oihw, bias, gamma, beta):
    """Pure-JAX reference (f32 conv, train-mode BN, ReLU)."""
    conv = lax.conv_general_dilated(
        x_nchw.astype(jnp.float32), w_oihw.astype(jnp.float32),
        window_strides=(1, 1), padding=[(PAD, PAD), (PAD, PAD)],
        dimension_numbers=("NCHW", "OIHW", "NCHW"),
        precision=lax.Precision.HIGHEST)
    conv = conv + bias.reshape(1, -1, 1, 1)
    mean = jnp.mean(conv, axis=(0, 2, 3), keepdims=True)
    var = jnp.mean((conv - mean) ** 2, axis=(0, 2, 3), keepdims=True)
    y = (conv - mean) * lax.rsqrt(var + EPS)
    y = y * gamma.reshape(1, -1, 1, 1) + beta.reshape(1, -1, 1, 1)
    return jnp.maximum(y, 0.0)


if __name__ == "__main__":
    key = jax.random.PRNGKey(0)
    k_x, k_w, k_b, k_g, k_be = jax.random.split(key, 5)

    N, Cin, Cout, H, W = 2, 4, 8, 16, 16

    x = jax.random.normal(k_x, (N, Cin, H, W), dtype=jnp.float32)
    # deterministic parameter init (synthetic; not a checkpoint load)
    w = jax.random.normal(k_w, (Cout, Cin, K, K), dtype=jnp.float32) * 0.1
    b = jax.random.normal(k_b, (Cout,), dtype=jnp.float32) * 0.1
    gamma = 1.0 + 0.1 * jax.random.normal(k_g, (Cout,), dtype=jnp.float32)
    beta = 0.1 * jax.random.normal(k_be, (Cout,), dtype=jnp.float32)

    out = jax.block_until_ready(cbn2d(x, w, b, gamma, beta))
    assert out.shape == (N, Cout, H, W)

    # Tight check: the kernel feeds the MXU in bf16 (f32 accumulation), so compare
    # against a reference whose inputs/weights are rounded to bf16 the same way.
    x_bf = x.astype(jnp.bfloat16).astype(jnp.float32)
    w_bf = w.astype(jnp.bfloat16).astype(jnp.float32)
    ref_bf = cbn2d_ref(x_bf, w_bf, b, gamma, beta)
    err_bf = float(jnp.max(jnp.abs(out - ref_bf)))
    assert err_bf < 5e-3, f"mismatch vs bf16-rounded reference: {err_bf}"

    # Loose sanity check against the full-f32 reference (bf16-level tolerance).
    ref32 = cbn2d_ref(x, w, b, gamma, beta)
    err32 = float(jnp.max(jnp.abs(out - ref32)))
    assert err32 < 5e-2, f"mismatch vs f32 reference: {err32}"

    print("KERNEL_OK")
</pallas_src>

<mosaic_0001>
module attributes {stable_mosaic.version = 11 : i64} {
  func.func @_bn_relu_kernel(%arg0: i32, %arg1: memref<1x8x256xf32, #tpu.memory_space<vmem>>, %arg2: memref<2x8x1xf32, #tpu.memory_space<vmem>>, %arg3: memref<2x8x1xf32, #tpu.memory_space<vmem>>, %arg4: memref<8x1xf32, #tpu.memory_space<vmem>>, %arg5: memref<8x1xf32, #tpu.memory_space<vmem>>, %arg6: memref<1x8x256xf32, #tpu.memory_space<vmem>>) attributes {dimension_semantics = [#tpu.dimension_semantics<parallel>], iteration_bounds = array<i64: 2>, scalar_prefetch = 0 : i64, scratch_operands = 0 : i64, tpu.core_type = #tpu.core_type<tc>, window_params = [{transform_indices = @transform_0, window_bounds = array<i64: 1, 8, 256>}, {pipeline_mode = #tpu.pipeline_mode<synchronous>, transform_indices = @transform_1, window_bounds = array<i64: 2, 8, 1>}, {pipeline_mode = #tpu.pipeline_mode<synchronous>, transform_indices = @transform_2, window_bounds = array<i64: 2, 8, 1>}, {pipeline_mode = #tpu.pipeline_mode<synchronous>, transform_indices = @transform_3, window_bounds = array<i64: 8, 1>}, {pipeline_mode = #tpu.pipeline_mode<synchronous>, transform_indices = @transform_4, window_bounds = array<i64: 8, 1>}, {transform_indices = @transform_5, window_bounds = array<i64: 1, 8, 256>}]} {
    %c0 = arith.constant 0 : index
    %c0_0 = arith.constant 0 : index
    %c0_1 = arith.constant 0 : index
    %0 = vector.load %arg2[%c0, %c0_0, %c0_1] : memref<2x8x1xf32, #tpu.memory_space<vmem>>, vector<2x8x1xf32>
    %cst = arith.constant dense<0.000000e+00> : vector<8x1xf32>
    %1 = vector.multi_reduction <add>, %0, %cst [0] : vector<2x8x1xf32> to vector<8x1xf32>
    %cst_2 = arith.constant 0.001953125 : f32
    %2 = vector.broadcast %cst_2 : f32 to vector<8x1xf32>
    %3 = arith.mulf %1, %2 : vector<8x1xf32>
    %c0_3 = arith.constant 0 : index
    %c0_4 = arith.constant 0 : index
    %c0_5 = arith.constant 0 : index
    %4 = vector.load %arg3[%c0_3, %c0_4, %c0_5] : memref<2x8x1xf32, #tpu.memory_space<vmem>>, vector<2x8x1xf32>
    %cst_6 = arith.constant dense<0.000000e+00> : vector<8x1xf32>
    %5 = vector.multi_reduction <add>, %4, %cst_6 [0] : vector<2x8x1xf32> to vector<8x1xf32>
    %cst_7 = arith.constant 0.001953125 : f32
    %6 = vector.broadcast %cst_7 : f32 to vector<8x1xf32>
    %7 = arith.mulf %5, %6 : vector<8x1xf32>
    %8 = arith.mulf %3, %3 : vector<8x1xf32>
    %9 = arith.subf %7, %8 : vector<8x1xf32>
    %cst_8 = arith.constant 0.000000e+00 : f32
    %10 = vector.broadcast %cst_8 : f32 to vector<8x1xf32>
    %11 = arith.maximumf %9, %10 : vector<8x1xf32>
    %cst_9 = arith.constant 9.99999974E-6 : f32
    %12 = vector.broadcast %cst_9 : f32 to vector<8x1xf32>
    %13 = arith.addf %11, %12 : vector<8x1xf32>
    %14 = math.rsqrt %13 : vector<8x1xf32>
    %c0_10 = arith.constant 0 : index
    %c0_11 = arith.constant 0 : index
    %15 = vector.load %arg4[%c0_10, %c0_11] : memref<8x1xf32, #tpu.memory_space<vmem>>, vector<8x1xf32>
    %16 = arith.mulf %15, %14 : vector<8x1xf32>
    %c0_12 = arith.constant 0 : index
    %c0_13 = arith.constant 0 : index
    %17 = vector.load %arg5[%c0_12, %c0_13] : memref<8x1xf32, #tpu.memory_space<vmem>>, vector<8x1xf32>
    %18 = arith.mulf %3, %16 : vector<8x1xf32>
    %19 = arith.subf %17, %18 : vector<8x1xf32>
    %c0_14 = arith.constant 0 : index
    %c0_15 = arith.constant 0 : index
    %c0_16 = arith.constant 0 : index
    %20 = vector.load %arg1[%c0_14, %c0_15, %c0_16] : memref<1x8x256xf32, #tpu.memory_space<vmem>>, vector<1x8x256xf32>
    %21 = vector.shape_cast %20 : vector<1x8x256xf32> to vector<8x256xf32>
    %22 = vector.broadcast %16 : vector<8x1xf32> to vector<8x256xf32>
    %23 = arith.mulf %21, %22 : vector<8x256xf32>
    %24 = vector.broadcast %19 : vector<8x1xf32> to vector<8x256xf32>
    %25 = arith.addf %23, %24 : vector<8x256xf32>
    %cst_17 = arith.constant 0.000000e+00 : f32
    %26 = vector.broadcast %cst_17 : f32 to vector<8x256xf32>
    %27 = arith.maximumf %25, %26 : vector<8x256xf32>
    %c0_18 = arith.constant 0 : index
    %c0_19 = arith.constant 0 : index
    %c0_20 = arith.constant 0 : index
    %28 = vector.load %arg6[%c0_18, %c0_19, %c0_20] : memref<1x8x256xf32, #tpu.memory_space<vmem>>, vector<1x8x256xf32>
    %29 = vector.shape_cast %28 : vector<1x8x256xf32> to vector<8x256xf32>
    %30 = vector.shape_cast %27 : vector<8x256xf32> to vector<1x8x256xf32>
    tpu.vector_store %arg6[%c0_18, %c0_19, %c0_20], %30 {strides = array<i32>} : memref<1x8x256xf32, #tpu.memory_space<vmem>>, vector<1x8x256xf32>,
    return
  }
  func.func @transform_0(%arg0: i32) -> (i32, i32, i32) {
    %c0_i32 = arith.constant 0 : i32
    %c0_i32_0 = arith.constant 0 : i32
    %c0_i32_1 = arith.constant 0 : i32
    return %arg0, %c0_i32, %c0_i32_0 : i32, i32, i32
  }
  func.func @transform_1(%arg0: i32) -> (i32, i32, i32) {
    %c0_i32 = arith.constant 0 : i32
    %c0_i32_0 = arith.constant 0 : i32
    %c0_i32_1 = arith.constant 0 : i32
    %c0_i32_2 = arith.constant 0 : i32
    return %c0_i32, %c0_i32_0, %c0_i32_1 : i32, i32, i32
  }
  func.func @transform_2(%arg0: i32) -> (i32, i32, i32) {
    %c0_i32 = arith.constant 0 : i32
    %c0_i32_0 = arith.constant 0 : i32
    %c0_i32_1 = arith.constant 0 : i32
    %c0_i32_2 = arith.constant 0 : i32
    return %c0_i32, %c0_i32_0, %c0_i32_1 : i32, i32, i32
  }
  func.func @transform_3(%arg0: i32) -> (i32, i32) {
    %c0_i32 = arith.constant 0 : i32
    %c0_i32_0 = arith.constant 0 : i32
    %c0_i32_1 = arith.constant 0 : i32
    return %c0_i32, %c0_i32_0 : i32, i32
  }
  func.func @transform_4(%arg0: i32) -> (i32, i32) {
    %c0_i32 = arith.constant 0 : i32
    %c0_i32_0 = arith.constant 0 : i32
    %c0_i32_1 = arith.constant 0 : i32
    return %c0_i32, %c0_i32_0 : i32, i32
  }
  func.func @transform_5(%arg0: i32) -> (i32, i32, i32) {
    %c0_i32 = arith.constant 0 : i32
    %c0_i32_0 = arith.constant 0 : i32
    %c0_i32_1 = arith.constant 0 : i32
    return %arg0, %c0_i32, %c0_i32_0 : i32, i32, i32
  }
}

module attributes {stable_mosaic.version = 11 : i64} {
  func.func @_conv_stats_kernel(%arg0: i32, %arg1: memref<1x4x256xf32, #tpu.memory_space<vmem>>, %arg2: memref<8x256xbf16, #tpu.memory_space<vmem>>, %arg3: memref<8x1xf32, #tpu.memory_space<vmem>>, %arg4: memref<1x8x256xf32, #tpu.memory_space<vmem>>, %arg5: memref<1x8x1xf32, #tpu.memory_space<vmem>>, %arg6: memref<1x8x1xf32, #tpu.memory_space<vmem>>, %arg7: memref<4x404xf32, #tpu.memory_space<vmem>>, %arg8: memref<256x320xf32, #tpu.memory_space<vmem>>) attributes {dimension_semantics = [#tpu.dimension_semantics<parallel>], iteration_bounds = array<i64: 2>, scalar_prefetch = 0 : i64, scratch_operands = 2 : i64, tpu.core_type = #tpu.core_type<tc>, window_params = [{transform_indices = @transform_0, window_bounds = array<i64: 1, 4, 256>}, {pipeline_mode = #tpu.pipeline_mode<synchronous>, transform_indices = @transform_1, window_bounds = array<i64: 8, 256>}, {pipeline_mode = #tpu.pipeline_mode<synchronous>, transform_indices = @transform_2, window_bounds = array<i64: 8, 1>}, {transform_indices = @transform_3, window_bounds = array<i64: 1, 8, 256>}, {transform_indices = @transform_4, window_bounds = array<i64: 1, 8, 1>}, {transform_indices = @transform_5, window_bounds = array<i64: 1, 8, 1>}]} {
    %cst = arith.constant 0.000000e+00 : f32
    %0 = vector.broadcast %cst : f32 to vector<4x404xf32>
    %c0 = arith.constant 0 : index
    %c0_0 = arith.constant 0 : index
    %1 = vector.load %arg7[%c0, %c0_0] : memref<4x404xf32, #tpu.memory_space<vmem>>, vector<4x404xf32>
    tpu.vector_store %arg7[%c0, %c0_0], %0 {strides = array<i32>} : memref<4x404xf32, #tpu.memory_space<vmem>>, vector<4x404xf32>,
    %cst_1 = arith.constant 0.000000e+00 : f32
    %2 = vector.broadcast %cst_1 : f32 to vector<256x320xf32>
    %c0_2 = arith.constant 0 : index
    %c0_3 = arith.constant 0 : index
    %3 = vector.load %arg8[%c0_2, %c0_3] : memref<256x320xf32, #tpu.memory_space<vmem>>, vector<256x320xf32>
    tpu.vector_store %arg8[%c0_2, %c0_3], %2 {strides = array<i32>} : memref<256x320xf32, #tpu.memory_space<vmem>>, vector<256x320xf32>,
    %c0_4 = arith.constant 0 : index
    %c0_5 = arith.constant 0 : index
    %c0_6 = arith.constant 0 : index
    %4 = vector.load %arg1[%c0_4, %c0_5, %c0_6] : memref<1x4x256xf32, #tpu.memory_space<vmem>>, vector<1x4x16xf32>
    %5 = vector.shape_cast %4 : vector<1x4x16xf32> to vector<4x16xf32>
    %c0_7 = arith.constant 0 : index
    %c42 = arith.constant 42 : index
    %6 = vector.load %arg7[%c0_7, %c42] : memref<4x404xf32, #tpu.memory_space<vmem>>, vector<4x16xf32>
    tpu.vector_store %arg7[%c0_7, %c42], %5 {strides = array<i32>} : memref<4x404xf32, #tpu.memory_space<vmem>>, vector<4x16xf32>,
    %c0_8 = arith.constant 0 : index
    %c0_9 = arith.constant 0 : index
    %c16 = arith.constant 16 : index
    %7 = vector.load %arg1[%c0_8, %c0_9, %c16] : memref<1x4x256xf32, #tpu.memory_space<vmem>>, vector<1x4x16xf32>
    %8 = vector.shape_cast %7 : vector<1x4x16xf32> to vector<4x16xf32>
    %c0_10 = arith.constant 0 : index
    %c62 = arith.constant 62 : index
    %9 = vector.load %arg7[%c0_10, %c62] : memref<4x404xf32, #tpu.memory_space<vmem>>, vector<4x16xf32>
    tpu.vector_store %arg7[%c0_10, %c62], %8 {strides = array<i32>} : memref<4x404xf32, #tpu.memory_space<vmem>>, vector<4x16xf32>,
    %c0_11 = arith.constant 0 : index
    %c0_12 = arith.constant 0 : index
    %c32 = arith.constant 32 : index
    %10 = vector.load %arg1[%c0_11, %c0_12, %c32] : memref<1x4x256xf32, #tpu.memory_space<vmem>>, vector<1x4x16xf32>
    %11 = vector.shape_cast %10 : vector<1x4x16xf32> to vector<4x16xf32>
    %c0_13 = arith.constant 0 : index
    %c82 = arith.constant 82 : index
    %12 = vector.load %arg7[%c0_13, %c82] : memref<4x404xf32, #tpu.memory_space<vmem>>, vector<4x16xf32>
    tpu.vector_store %arg7[%c0_13, %c82], %11 {strides = array<i32>} : memref<4x404xf32, #tpu.memory_space<vmem>>, vector<4x16xf32>,
    %c0_14 = arith.constant 0 : index
    %c0_15 = arith.constant 0 : index
    %c48 = arith.constant 48 : index
    %13 = vector.load %arg1[%c0_14, %c0_15, %c48] : memref<1x4x256xf32, #tpu.memory_space<vmem>>, vector<1x4x16xf32>
    %14 = vector.shape_cast %13 : vector<1x4x16xf32> to vector<4x16xf32>
    %c0_16 = arith.constant 0 : index
    %c102 = arith.constant 102 : index
    %15 = vector.load %arg7[%c0_16, %c102] : memref<4x404xf32, #tpu.memory_space<vmem>>, vector<4x16xf32>
    tpu.vector_store %arg7[%c0_16, %c102], %14 {strides = array<i32>} : memref<4x404xf32, #tpu.memory_space<vmem>>, vector<4x16xf32>,
    %c0_17 = arith.constant 0 : index
    %c0_18 = arith.constant 0 : index
    %c64 = arith.constant 64 : index
    %16 = vector.load %arg1[%c0_17, %c0_18, %c64] : memref<1x4x256xf32, #tpu.memory_space<vmem>>, vector<1x4x16xf32>
    %17 = vector.shape_cast %16 : vector<1x4x16xf32> to vector<4x16xf32>
    %c0_19 = arith.constant 0 : index
    %c122 = arith.constant 122 : index
    %18 = vector.load %arg7[%c0_19, %c122] : memref<4x404xf32, #tpu.memory_space<vmem>>, vector<4x16xf32>
    tpu.vector_store %arg7[%c0_19, %c122], %17 {strides = array<i32>} : memref<4x404xf32, #tpu.memory_space<vmem>>, vector<4x16xf32>,
    %c0_20 = arith.constant 0 : index
    %c0_21 = arith.constant 0 : index
    %c80 = arith.constant 80 : index
    %19 = vector.load %arg1[%c0_20, %c0_21, %c80] : memref<1x4x256xf32, #tpu.memory_space<vmem>>, vector<1x4x16xf32>
    %20 = vector.shape_cast %19 : vector<1x4x16xf32> to vector<4x16xf32>
    %c0_22 = arith.constant 0 : index
    %c142 = arith.constant 142 : index
    %21 = vector.load %arg7[%c0_22, %c142] : memref<4x404xf32, #tpu.memory_space<vmem>>, vector<4x16xf32>
    tpu.vector_store %arg7[%c0_22, %c142], %20 {strides = array<i32>} : memref<4x404xf32, #tpu.memory_space<vmem>>, vector<4x16xf32>,
    %c0_23 = arith.constant 0 : index
    %c0_24 = arith.constant 0 : index
    %c96 = arith.constant 96 : index
    %22 = vector.load %arg1[%c0_23, %c0_24, %c96] : memref<1x4x256xf32, #tpu.memory_space<vmem>>, vector<1x4x16xf32>
    %23 = vector.shape_cast %22 : vector<1x4x16xf32> to vector<4x16xf32>
    %c0_25 = arith.constant 0 : index
    %c162 = arith.constant 162 : index
    %24 = vector.load %arg7[%c0_25, %c162] : memref<4x404xf32, #tpu.memory_space<vmem>>, vector<4x16xf32>
    tpu.vector_store %arg7[%c0_25, %c162], %23 {strides = array<i32>} : memref<4x404xf32, #tpu.memory_space<vmem>>, vector<4x16xf32>,
    %c0_26 = arith.constant 0 : index
    %c0_27 = arith.constant 0 : index
    %c112 = arith.constant 112 : index
    %25 = vector.load %arg1[%c0_26, %c0_27, %c112] : memref<1x4x256xf32, #tpu.memory_space<vmem>>, vector<1x4x16xf32>
    %26 = vector.shape_cast %25 : vector<1x4x16xf32> to vector<4x16xf32>
    %c0_28 = arith.constant 0 : index
    %c182 = arith.constant 182 : index
    %27 = vector.load %arg7[%c0_28, %c182] : memref<4x404xf32, #tpu.memory_space<vmem>>, vector<4x16xf32>
    tpu.vector_store %arg7[%c0_28, %c182], %26 {strides = array<i32>} : memref<4x404xf32, #tpu.memory_space<vmem>>, vector<4x16xf32>,
    %c0_29 = arith.constant 0 : index
    %c0_30 = arith.constant 0 : index
    %c128 = arith.constant 128 : index
    %28 = vector.load %arg1[%c0_29, %c0_30, %c128] : memref<1x4x256xf32, #tpu.memory_space<vmem>>, vector<1x4x16xf32>
    %29 = vector.shape_cast %28 : vector<1x4x16xf32> to vector<4x16xf32>
    %c0_31 = arith.constant 0 : index
    %c202 = arith.constant 202 : index
    %30 = vector.load %arg7[%c0_31, %c202] : memref<4x404xf32, #tpu.memory_space<vmem>>, vector<4x16xf32>
    tpu.vector_store %arg7[%c0_31, %c202], %29 {strides = array<i32>} : memref<4x404xf32, #tpu.memory_space<vmem>>, vector<4x16xf32>,
    %c0_32 = arith.constant 0 : index
    %c0_33 = arith.constant 0 : index
    %c144 = arith.constant 144 : index
    %31 = vector.load %arg1[%c0_32, %c0_33, %c144] : memref<1x4x256xf32, #tpu.memory_space<vmem>>, vector<1x4x16xf32>
    %32 = vector.shape_cast %31 : vector<1x4x16xf32> to vector<4x16xf32>
    %c0_34 = arith.constant 0 : index
    %c222 = arith.constant 222 : index
    %33 = vector.load %arg7[%c0_34, %c222] : memref<4x404xf32, #tpu.memory_space<vmem>>, vector<4x16xf32>
    tpu.vector_store %arg7[%c0_34, %c222], %32 {strides = array<i32>} : memref<4x404xf32, #tpu.memory_space<vmem>>, vector<4x16xf32>,
    %c0_35 = arith.constant 0 : index
    %c0_36 = arith.constant 0 : index
    %c160 = arith.constant 160 : index
    %34 = vector.load %arg1[%c0_35, %c0_36, %c160] : memref<1x4x256xf32, #tpu.memory_space<vmem>>, vector<1x4x16xf32>
    %35 = vector.shape_cast %34 : vector<1x4x16xf32> to vector<4x16xf32>
    %c0_37 = arith.constant 0 : index
    %c242 = arith.constant 242 : index
    %36 = vector.load %arg7[%c0_37, %c242] : memref<4x404xf32, #tpu.memory_space<vmem>>, vector<4x16xf32>
    tpu.vector_store %arg7[%c0_37, %c242], %35 {strides = array<i32>} : memref<4x404xf32, #tpu.memory_space<vmem>>, vector<4x16xf32>,
    %c0_38 = arith.constant 0 : index
    %c0_39 = arith.constant 0 : index
    %c176 = arith.constant 176 : index
    %37 = vector.load %arg1[%c0_38, %c0_39, %c176] : memref<1x4x256xf32, #tpu.memory_space<vmem>>, vector<1x4x16xf32>
    %38 = vector.shape_cast %37 : vector<1x4x16xf32> to vector<4x16xf32>
    %c0_40 = arith.constant 0 : index
    %c262 = arith.constant 262 : index
    %39 = vector.load %arg7[%c0_40, %c262] : memref<4x404xf32, #tpu.memory_space<vmem>>, vector<4x16xf32>
    tpu.vector_store %arg7[%c0_40, %c262], %38 {strides = array<i32>} : memref<4x404xf32, #tpu.memory_space<vmem>>, vector<4x16xf32>,
    %c0_41 = arith.constant 0 : index
    %c0_42 = arith.constant 0 : index
    %c192 = arith.constant 192 : index
    %40 = vector.load %arg1[%c0_41, %c0_42, %c192] : memref<1x4x256xf32, #tpu.memory_space<vmem>>, vector<1x4x16xf32>
    %41 = vector.shape_cast %40 : vector<1x4x16xf32> to vector<4x16xf32>
    %c0_43 = arith.constant 0 : index
    %c282 = arith.constant 282 : index
    %42 = vector.load %arg7[%c0_43, %c282] : memref<4x404xf32, #tpu.memory_space<vmem>>, vector<4x16xf32>
    tpu.vector_store %arg7[%c0_43, %c282], %41 {strides = array<i32>} : memref<4x404xf32, #tpu.memory_space<vmem>>, vector<4x16xf32>,
    %c0_44 = arith.constant 0 : index
    %c0_45 = arith.constant 0 : index
    %c208 = arith.constant 208 : index
    %43 = vector.load %arg1[%c0_44, %c0_45, %c208] : memref<1x4x256xf32, #tpu.memory_space<vmem>>, vector<1x4x16xf32>
    %44 = vector.shape_cast %43 : vector<1x4x16xf32> to vector<4x16xf32>
    %c0_46 = arith.constant 0 : index
    %c302 = arith.constant 302 : index
    %45 = vector.load %arg7[%c0_46, %c302] : memref<4x404xf32, #tpu.memory_space<vmem>>, vector<4x16xf32>
    tpu.vector_store %arg7[%c0_46, %c302], %44 {strides = array<i32>} : memref<4x404xf32, #tpu.memory_space<vmem>>, vector<4x16xf32>,
    %c0_47 = arith.constant 0 : index
    %c0_48 = arith.constant 0 : index
    %c224 = arith.constant 224 : index
    %46 = vector.load %arg1[%c0_47, %c0_48, %c224] : memref<1x4x256xf32, #tpu.memory_space<vmem>>, vector<1x4x16xf32>
    %47 = vector.shape_cast %46 : vector<1x4x16xf32> to vector<4x16xf32>
    %c0_49 = arith.constant 0 : index
    %c322 = arith.constant 322 : index
    %48 = vector.load %arg7[%c0_49, %c322] : memref<4x404xf32, #tpu.memory_space<vmem>>, vector<4x16xf32>
    tpu.vector_store %arg7[%c0_49, %c322], %47 {strides = array<i32>} : memref<4x404xf32, #tpu.memory_space<vmem>>, vector<4x16xf32>,
    %c0_50 = arith.constant 0 : index
    %c0_51 = arith.constant 0 : index
    %c240 = arith.constant 240 : index
    %49 = vector.load %arg1[%c0_50, %c0_51, %c240] : memref<1x4x256xf32, #tpu.memory_space<vmem>>, vector<1x4x16xf32>
    %50 = vector.shape_cast %49 : vector<1x4x16xf32> to vector<4x16xf32>
    %c0_52 = arith.constant 0 : index
    %c342 = arith.constant 342 : index
    %51 = vector.load %arg7[%c0_52, %c342] : memref<4x404xf32, #tpu.memory_space<vmem>>, vector<4x16xf32>
    tpu.vector_store %arg7[%c0_52, %c342], %50 {strides = array<i32>} : memref<4x404xf32, #tpu.memory_space<vmem>>, vector<4x16xf32>,
    %c0_53 = arith.constant 0 : index
    %c0_54 = arith.constant 0 : index
    %52 = vector.load %arg7[%c0_53, %c0_54] : memref<4x404xf32, #tpu.memory_space<vmem>>, vector<4x320xf32>
    %c0_55 = arith.constant 0 : index
    %c0_56 = arith.constant 0 : index
    %53 = vector.load %arg8[%c0_55, %c0_56] : memref<256x320xf32, #tpu.memory_space<vmem>>, vector<4x320xf32>
    tpu.vector_store %arg8[%c0_55, %c0_56], %52 {strides = array<i32>} : memref<256x320xf32, #tpu.memory_space<vmem>>, vector<4x320xf32>,
    %c0_57 = arith.constant 0 : index
    %c1 = arith.constant 1 : index
    %54 = vector.load %arg7[%c0_57, %c1] : memref<4x404xf32, #tpu.memory_space<vmem>>, vector<4x320xf32>
    %c8 = arith.constant 8 : index
    %c0_58 = arith.constant 0 : index
    %55 = vector.load %arg8[%c8, %c0_58] : memref<256x320xf32, #tpu.memory_space<vmem>>, vector<4x320xf32>
    tpu.vector_store %arg8[%c8, %c0_58], %54 {strides = array<i32>} : memref<256x320xf32, #tpu.memory_space<vmem>>, vector<4x320xf32>,
    %c0_59 = arith.constant 0 : index
    %c2 = arith.constant 2 : index
    %56 = vector.load %arg7[%c0_59, %c2] : memref<4x404xf32, #tpu.memory_space<vmem>>, vector<4x320xf32>
    %c16_60 = arith.constant 16 : index
    %c0_61 = arith.constant 0 : index
    %57 = vector.load %arg8[%c16_60, %c0_61] : memref<256x320xf32, #tpu.memory_space<vmem>>, vector<4x320xf32>
    tpu.vector_store %arg8[%c16_60, %c0_61], %56 {strides = array<i32>} : memref<256x320xf32, #tpu.memory_space<vmem>>, vector<4x320xf32>,
    %c0_62 = arith.constant 0 : index
    %c3 = arith.constant 3 : index
    %58 = vector.load %arg7[%c0_62, %c3] : memref<4x404xf32, #tpu.memory_space<vmem>>, vector<4x320xf32>
    %c24 = arith.constant 24 : index
    %c0_63 = arith.constant 0 : index
    %59 = vector.load %arg8[%c24, %c0_63] : memref<256x320xf32, #tpu.memory_space<vmem>>, vector<4x320xf32>
    tpu.vector_store %arg8[%c24, %c0_63], %58 {strides = array<i32>} : memref<256x320xf32, #tpu.memory_space<vmem>>, vector<4x320xf32>,
    %c0_64 = arith.constant 0 : index
    %c4 = arith.constant 4 : index
    %60 = vector.load %arg7[%c0_64, %c4] : memref<4x404xf32, #tpu.memory_space<vmem>>, vector<4x320xf32>
    %c32_65 = arith.constant 32 : index
    %c0_66 = arith.constant 0 : index
    %61 = vector.load %arg8[%c32_65, %c0_66] : memref<256x320xf32, #tpu.memory_space<vmem>>, vector<4x320xf32>
    tpu.vector_store %arg8[%c32_65, %c0_66], %60 {strides = array<i32>} : memref<256x320xf32, #tpu.memory_space<vmem>>, vector<4x320xf32>,
    %c0_67 = arith.constant 0 : index
    %c20 = arith.constant 20 : index
    %62 = vector.load %arg7[%c0_67, %c20] : memref<4x404xf32, #tpu.memory_space<vmem>>, vector<4x320xf32>
    %c40 = arith.constant 40 : index
    %c0_68 = arith.constant 0 : index
    %63 = vector.load %arg8[%c40, %c0_68] : memref<256x320xf32, #tpu.memory_space<vmem>>, vector<4x320xf32>
    tpu.vector_store %arg8[%c40, %c0_68], %62 {strides = array<i32>} : memref<256x320xf32, #tpu.memory_space<vmem>>, vector<4x320xf32>,
    %c0_69 = arith.constant 0 : index
    %c21 = arith.constant 21 : index
    %64 = vector.load %arg7[%c0_69, %c21] : memref<4x404xf32, #tpu.memory_space<vmem>>, vector<4x320xf32>
    %c48_70 = arith.constant 48 : index
    %c0_71 = arith.constant 0 : index
    %65 = vector.load %arg8[%c48_70, %c0_71] : memref<256x320xf32, #tpu.memory_space<vmem>>, vector<4x320xf32>
    tpu.vector_store %arg8[%c48_70, %c0_71], %64 {strides = array<i32>} : memref<256x320xf32, #tpu.memory_space<vmem>>, vector<4x320xf32>,
    %c0_72 = arith.constant 0 : index
    %c22 = arith.constant 22 : index
    %66 = vector.load %arg7[%c0_72, %c22] : memref<4x404xf32, #tpu.memory_space<vmem>>, vector<4x320xf32>
    %c56 = arith.constant 56 : index
    %c0_73 = arith.constant 0 : index
    %67 = vector.load %arg8[%c56, %c0_73] : memref<256x320xf32, #tpu.memory_space<vmem>>, vector<4x320xf32>
    tpu.vector_store %arg8[%c56, %c0_73], %66 {strides = array<i32>} : memref<256x320xf32, #tpu.memory_space<vmem>>, vector<4x320xf32>,
    %c0_74 = arith.constant 0 : index
    %c23 = arith.constant 23 : index
    %68 = vector.load %arg7[%c0_74, %c23] : memref<4x404xf32, #tpu.memory_space<vmem>>, vector<4x320xf32>
    %c64_75 = arith.constant 64 : index
    %c0_76 = arith.constant 0 : index
    %69 = vector.load %arg8[%c64_75, %c0_76] : memref<256x320xf32, #tpu.memory_space<vmem>>, vector<4x320xf32>
    tpu.vector_store %arg8[%c64_75, %c0_76], %68 {strides = array<i32>} : memref<256x320xf32, #tpu.memory_space<vmem>>, vector<4x320xf32>,
    %c0_77 = arith.constant 0 : index
    %c24_78 = arith.constant 24 : index
    %70 = vector.load %arg7[%c0_77, %c24_78] : memref<4x404xf32, #tpu.memory_space<vmem>>, vector<4x320xf32>
    %c72 = arith.constant 72 : index
    %c0_79 = arith.constant 0 : index
    %71 = vector.load %arg8[%c72, %c0_79] : memref<256x320xf32, #tpu.memory_space<vmem>>, vector<4x320xf32>
    tpu.vector_store %arg8[%c72, %c0_79], %70 {strides = array<i32>} : memref<256x320xf32, #tpu.memory_space<vmem>>, vector<4x320xf32>,
    %c0_80 = arith.constant 0 : index
    %c40_81 = arith.constant 40 : index
    %72 = vector.load %arg7[%c0_80, %c40_81] : memref<4x404xf32, #tpu.memory_space<vmem>>, vector<4x320xf32>
    %c80_82 = arith.constant 80 : index
    %c0_83 = arith.constant 0 : index
    %73 = vector.load %arg8[%c80_82, %c0_83] : memref<256x320xf32, #tpu.memory_space<vmem>>, vector<4x320xf32>
    tpu.vector_store %arg8[%c80_82, %c0_83], %72 {strides = array<i32>} : memref<256x320xf32, #tpu.memory_space<vmem>>, vector<4x320xf32>,
    %c0_84 = arith.constant 0 : index
    %c41 = arith.constant 41 : index
    %74 = vector.load %arg7[%c0_84, %c41] : memref<4x404xf32, #tpu.memory_space<vmem>>, vector<4x320xf32>
    %c88 = arith.constant 88 : index
    %c0_85 = arith.constant 0 : index
    %75 = vector.load %arg8[%c88, %c0_85] : memref<256x320xf32, #tpu.memory_space<vmem>>, vector<4x320xf32>
    tpu.vector_store %arg8[%c88, %c0_85], %74 {strides = array<i32>} : memref<256x320xf32, #tpu.memory_space<vmem>>, vector<4x320xf32>,
    %c0_86 = arith.constant 0 : index
    %c42_87 = arith.constant 42 : index
    %76 = vector.load %arg7[%c0_86, %c42_87] : memref<4x404xf32, #tpu.memory_space<vmem>>, vector<4x320xf32>
    %c96_88 = arith.constant 96 : index
    %c0_89 = arith.constant 0 : index
    %77 = vector.load %arg8[%c96_88, %c0_89] : memref<256x320xf32, #tpu.memory_space<vmem>>, vector<4x320xf32>
    tpu.vector_store %arg8[%c96_88, %c0_89], %76 {strides = array<i32>} : memref<256x320xf32, #tpu.memory_space<vmem>>, vector<4x320xf32>,
    %c0_90 = arith.constant 0 : index
    %c43 = arith.constant 43 : index
    %78 = vector.load %arg7[%c0_90, %c43] : memref<4x404xf32, #tpu.memory_space<vmem>>, vector<4x320xf32>
    %c104 = arith.constant 104 : index
    %c0_91 = arith.constant 0 : index
    %79 = vector.load %arg8[%c104, %c0_91] : memref<256x320xf32, #tpu.memory_space<vmem>>, vector<4x320xf32>
    tpu.vector_store %arg8[%c104, %c0_91], %78 {strides = array<i32>} : memref<256x320xf32, #tpu.memory_space<vmem>>, vector<4x320xf32>,
    %c0_92 = arith.constant 0 : index
    %c44 = arith.constant 44 : index
    %80 = vector.load %arg7[%c0_92, %c44] : memref<4x404xf32, #tpu.memory_space<vmem>>, vector<4x320xf32>
    %c112_93 = arith.constant 112 : index
    %c0_94 = arith.constant 0 : index
    %81 = vector.load %arg8[%c112_93, %c0_94] : memref<256x320xf32, #tpu.memory_space<vmem>>, vector<4x320xf32>
    tpu.vector_store %arg8[%c112_93, %c0_94], %80 {strides = array<i32>} : memref<256x320xf32, #tpu.memory_space<vmem>>, vector<4x320xf32>,
    %c0_95 = arith.constant 0 : index
    %c60 = arith.constant 60 : index
    %82 = vector.load %arg7[%c0_95, %c60] : memref<4x404xf32, #tpu.memory_space<vmem>>, vector<4x320xf32>
    %c120 = arith.constant 120 : index
    %c0_96 = arith.constant 0 : index
    %83 = vector.load %arg8[%c120, %c0_96] : memref<256x320xf32, #tpu.memory_space<vmem>>, vector<4x320xf32>
    tpu.vector_store %arg8[%c120, %c0_96], %82 {strides = array<i32>} : memref<256x320xf32, #tpu.memory_space<vmem>>, vector<4x320xf32>,
    %c0_97 = arith.constant 0 : index
    %c61 = arith.constant 61 : index
    %84 = vector.load %arg7[%c0_97, %c61] : memref<4x404xf32, #tpu.memory_space<vmem>>, vector<4x320xf32>
    %c128_98 = arith.constant 128 : index
    %c0_99 = arith.constant 0 : index
    %85 = vector.load %arg8[%c128_98, %c0_99] : memref<256x320xf32, #tpu.memory_space<vmem>>, vector<4x320xf32>
    tpu.vector_store %arg8[%c128_98, %c0_99], %84 {strides = array<i32>} : memref<256x320xf32, #tpu.memory_space<vmem>>, vector<4x320xf32>,
    %c0_100 = arith.constant 0 : index
    %c62_101 = arith.constant 62 : index
    %86 = vector.load %arg7[%c0_100, %c62_101] : memref<4x404xf32, #tpu.memory_space<vmem>>, vector<4x320xf32>
    %c136 = arith.constant 136 : index
    %c0_102 = arith.constant 0 : index
    %87 = vector.load %arg8[%c136, %c0_102] : memref<256x320xf32, #tpu.memory_space<vmem>>, vector<4x320xf32>
    tpu.vector_store %arg8[%c136, %c0_102], %86 {strides = array<i32>} : memref<256x320xf32, #tpu.memory_space<vmem>>, vector<4x320xf32>,
    %c0_103 = arith.constant 0 : index
    %c63 = arith.constant 63 : index
    %88 = vector.load %arg7[%c0_103, %c63] : memref<4x404xf32, #tpu.memory_space<vmem>>, vector<4x320xf32>
    %c144_104 = arith.constant 144 : index
    %c0_105 = arith.constant 0 : index
    %89 = vector.load %arg8[%c144_104, %c0_105] : memref<256x320xf32, #tpu.memory_space<vmem>>, vector<4x320xf32>
    tpu.vector_store %arg8[%c144_104, %c0_105], %88 {strides = array<i32>} : memref<256x320xf32, #tpu.memory_space<vmem>>, vector<4x320xf32>,
    %c0_106 = arith.constant 0 : index
    %c64_107 = arith.constant 64 : index
    %90 = vector.load %arg7[%c0_106, %c64_107] : memref<4x404xf32, #tpu.memory_space<vmem>>, vector<4x320xf32>
    %c152 = arith.constant 152 : index
    %c0_108 = arith.constant 0 : index
    %91 = vector.load %arg8[%c152, %c0_108] : memref<256x320xf32, #tpu.memory_space<vmem>>, vector<4x320xf32>
    tpu.vector_store %arg8[%c152, %c0_108], %90 {strides = array<i32>} : memref<256x320xf32, #tpu.memory_space<vmem>>, vector<4x320xf32>,
    %c0_109 = arith.constant 0 : index
    %c80_110 = arith.constant 80 : index
    %92 = vector.load %arg7[%c0_109, %c80_110] : memref<4x404xf32, #tpu.memory_space<vmem>>, vector<4x320xf32>
    %c160_111 = arith.constant 160 : index
    %c0_112 = arith.constant 0 : index
    %93 = vector.load %arg8[%c160_111, %c0_112] : memref<256x320xf32, #tpu.memory_space<vmem>>, vector<4x320xf32>
    tpu.vector_store %arg8[%c160_111, %c0_112], %92 {strides = array<i32>} : memref<256x320xf32, #tpu.memory_space<vmem>>, vector<4x320xf32>,
    %c0_113 = arith.constant 0 : index
    %c81 = arith.constant 81 : index
    %94 = vector.load %arg7[%c0_113, %c81] : memref<4x404xf32, #tpu.memory_space<vmem>>, vector<4x320xf32>
    %c168 = arith.constant 168 : index
    %c0_114 = arith.constant 0 : index
    %95 = vector.load %arg8[%c168, %c0_114] : memref<256x320xf32, #tpu.memory_space<vmem>>, vector<4x320xf32>
    tpu.vector_store %arg8[%c168, %c0_114], %94 {strides = array<i32>} : memref<256x320xf32, #tpu.memory_space<vmem>>, vector<4x320xf32>,
    %c0_115 = arith.constant 0 : index
    %c82_116 = arith.constant 82 : index
    %96 = vector.load %arg7[%c0_115, %c82_116] : memref<4x404xf32, #tpu.memory_space<vmem>>, vector<4x320xf32>
    %c176_117 = arith.constant 176 : index
    %c0_118 = arith.constant 0 : index
    %97 = vector.load %arg8[%c176_117, %c0_118] : memref<256x320xf32, #tpu.memory_space<vmem>>, vector<4x320xf32>
    tpu.vector_store %arg8[%c176_117, %c0_118], %96 {strides = array<i32>} : memref<256x320xf32, #tpu.memory_space<vmem>>, vector<4x320xf32>,
    %c0_119 = arith.constant 0 : index
    %c83 = arith.constant 83 : index
    %98 = vector.load %arg7[%c0_119, %c83] : memref<4x404xf32, #tpu.memory_space<vmem>>, vector<4x320xf32>
    %c184 = arith.constant 184 : index
    %c0_120 = arith.constant 0 : index
    %99 = vector.load %arg8[%c184, %c0_120] : memref<256x320xf32, #tpu.memory_space<vmem>>, vector<4x320xf32>
    tpu.vector_store %arg8[%c184, %c0_120], %98 {strides = array<i32>} : memref<256x320xf32, #tpu.memory_space<vmem>>, vector<4x320xf32>,
    %c0_121 = arith.constant 0 : index
    %c84 = arith.constant 84 : index
    %100 = vector.load %arg7[%c0_121, %c84] : memref<4x404xf32, #tpu.memory_space<vmem>>, vector<4x320xf32>
    %c192_122 = arith.constant 192 : index
    %c0_123 = arith.constant 0 : index
    %101 = vector.load %arg8[%c192_122, %c0_123] : memref<256x320xf32, #tpu.memory_space<vmem>>, vector<4x320xf32>
    tpu.vector_store %arg8[%c192_122, %c0_123], %100 {strides = array<i32>} : memref<256x320xf32, #tpu.memory_space<vmem>>, vector<4x320xf32>,
    %c0_124 = arith.constant 0 : index
    %c0_125 = arith.constant 0 : index
    %102 = vector.load %arg2[%c0_124, %c0_125] : memref<8x256xbf16, #tpu.memory_space<vmem>>, vector<8x256xbf16>
    %c0_126 = arith.constant 0 : index
    %c0_127 = arith.constant 0 : index
    %103 = vector.load %arg8[%c0_126, %c0_127] : memref<256x320xf32, #tpu.memory_space<vmem>>, vector<256x320xf32>
    %104 = arith.truncf %103 : vector<256x320xf32> to vector<256x320xbf16>
    %cst_128 = arith.constant dense<0.000000e+00> : vector<8x320xf32>
    %105 = tpu.matmul %102, %104, %cst_128 {dimension_numbers = #tpu.dot_dimension_numbers<[1], [0], [0], [1], [0, 0, 1, 1], [], []>} : vector<8x256xbf16>, vector<256x320xbf16>, vector<8x320xf32> -> vector<8x320xf32>
    %c0_129 = arith.constant 0 : index
    %c0_130 = arith.constant 0 : index
    %106 = vector.load %arg3[%c0_129, %c0_130] : memref<8x1xf32, #tpu.memory_space<vmem>>, vector<8x1xf32>
    %107 = vector.broadcast %106 : vector<8x1xf32> to vector<8x320xf32>
    %108 = arith.addf %105, %107 : vector<8x320xf32>
    %109 = vector.extract_strided_slice %108 {offsets = [0, 0], sizes = [8, 16], strides = [1, 1]} : vector<8x320xf32> to vector<8x16xf32>
    %c0_131 = arith.constant 0 : index
    %c0_132 = arith.constant 0 : index
    %c0_133 = arith.constant 0 : index
    %110 = vector.load %arg4[%c0_131, %c0_132, %c0_133] : memref<1x8x256xf32, #tpu.memory_space<vmem>>, vector<1x8x16xf32>
    %111 = vector.shape_cast %110 : vector<1x8x16xf32> to vector<8x16xf32>
    %112 = vector.shape_cast %109 : vector<8x16xf32> to vector<1x8x16xf32>
    tpu.vector_store %arg4[%c0_131, %c0_132, %c0_133], %112 {strides = array<i32>} : memref<1x8x256xf32, #tpu.memory_space<vmem>>, vector<1x8x16xf32>,
    %113 = vector.extract_strided_slice %108 {offsets = [0, 20], sizes = [8, 16], strides = [1, 1]} : vector<8x320xf32> to vector<8x16xf32>
    %c0_134 = arith.constant 0 : index
    %c0_135 = arith.constant 0 : index
    %c16_136 = arith.constant 16 : index
    %114 = vector.load %arg4[%c0_134, %c0_135, %c16_136] : memref<1x8x256xf32, #tpu.memory_space<vmem>>, vector<1x8x16xf32>
    %115 = vector.shape_cast %114 : vector<1x8x16xf32> to vector<8x16xf32>
    %116 = vector.shape_cast %113 : vector<8x16xf32> to vector<1x8x16xf32>
    tpu.vector_store %arg4[%c0_134, %c0_135, %c16_136], %116 {strides = array<i32>} : memref<1x8x256xf32, #tpu.memory_space<vmem>>, vector<1x8x16xf32>,
    %117 = vector.extract_strided_slice %108 {offsets = [0, 40], sizes = [8, 16], strides = [1, 1]} : vector<8x320xf32> to vector<8x16xf32>
    %c0_137 = arith.constant 0 : index
    %c0_138 = arith.constant 0 : index
    %c32_139 = arith.constant 32 : index
    %118 = vector.load %arg4[%c0_137, %c0_138, %c32_139] : memref<1x8x256xf32, #tpu.memory_space<vmem>>, vector<1x8x16xf32>
    %119 = vector.shape_cast %118 : vector<1x8x16xf32> to vector<8x16xf32>
    %120 = vector.shape_cast %117 : vector<8x16xf32> to vector<1x8x16xf32>
    tpu.vector_store %arg4[%c0_137, %c0_138, %c32_139], %120 {strides = array<i32>} : memref<1x8x256xf32, #tpu.memory_space<vmem>>, vector<1x8x16xf32>,
    %121 = vector.extract_strided_slice %108 {offsets = [0, 60], sizes = [8, 16], strides = [1, 1]} : vector<8x320xf32> to vector<8x16xf32>
    %c0_140 = arith.constant 0 : index
    %c0_141 = arith.constant 0 : index
    %c48_142 = arith.constant 48 : index
    %122 = vector.load %arg4[%c0_140, %c0_141, %c48_142] : memref<1x8x256xf32, #tpu.memory_space<vmem>>, vector<1x8x16xf32>
    %123 = vector.shape_cast %122 : vector<1x8x16xf32> to vector<8x16xf32>
    %124 = vector.shape_cast %121 : vector<8x16xf32> to vector<1x8x16xf32>
    tpu.vector_store %arg4[%c0_140, %c0_141, %c48_142], %124 {strides = array<i32>} : memref<1x8x256xf32, #tpu.memory_space<vmem>>, vector<1x8x16xf32>,
    %125 = vector.extract_strided_slice %108 {offsets = [0, 80], sizes = [8, 16], strides = [1, 1]} : vector<8x320xf32> to vector<8x16xf32>
    %c0_143 = arith.constant 0 : index
    %c0_144 = arith.constant 0 : index
    %c64_145 = arith.constant 64 : index
    %126 = vector.load %arg4[%c0_143, %c0_144, %c64_145] : memref<1x8x256xf32, #tpu.memory_space<vmem>>, vector<1x8x16xf32>
    %127 = vector.shape_cast %126 : vector<1x8x16xf32> to vector<8x16xf32>
    %128 = vector.shape_cast %125 : vector<8x16xf32> to vector<1x8x16xf32>
    tpu.vector_store %arg4[%c0_143, %c0_144, %c64_145], %128 {strides = array<i32>} : memref<1x8x256xf32, #tpu.memory_space<vmem>>, vector<1x8x16xf32>,
    %129 = vector.extract_strided_slice %108 {offsets = [0, 100], sizes = [8, 16], strides = [1, 1]} : vector<8x320xf32> to vector<8x16xf32>
    %c0_146 = arith.constant 0 : index
    %c0_147 = arith.constant 0 : index
    %c80_148 = arith.constant 80 : index
    %130 = vector.load %arg4[%c0_146, %c0_147, %c80_148] : memref<1x8x256xf32, #tpu.memory_space<vmem>>, vector<1x8x16xf32>
    %131 = vector.shape_cast %130 : vector<1x8x16xf32> to vector<8x16xf32>
    %132 = vector.shape_cast %129 : vector<8x16xf32> to vector<1x8x16xf32>
    tpu.vector_store %arg4[%c0_146, %c0_147, %c80_148], %132 {strides = array<i32>} : memref<1x8x256xf32, #tpu.memory_space<vmem>>, vector<1x8x16xf32>,
    %133 = vector.extract_strided_slice %108 {offsets = [0, 120], sizes = [8, 16], strides = [1, 1]} : vector<8x320xf32> to vector<8x16xf32>
    %c0_149 = arith.constant 0 : index
    %c0_150 = arith.constant 0 : index
    %c96_151 = arith.constant 96 : index
    %134 = vector.load %arg4[%c0_149, %c0_150, %c96_151] : memref<1x8x256xf32, #tpu.memory_space<vmem>>, vector<1x8x16xf32>
    %135 = vector.shape_cast %134 : vector<1x8x16xf32> to vector<8x16xf32>
    %136 = vector.shape_cast %133 : vector<8x16xf32> to vector<1x8x16xf32>
    tpu.vector_store %arg4[%c0_149, %c0_150, %c96_151], %136 {strides = array<i32>} : memref<1x8x256xf32, #tpu.memory_space<vmem>>, vector<1x8x16xf32>,
    %137 = vector.extract_strided_slice %108 {offsets = [0, 140], sizes = [8, 16], strides = [1, 1]} : vector<8x320xf32> to vector<8x16xf32>
    %c0_152 = arith.constant 0 : index
    %c0_153 = arith.constant 0 : index
    %c112_154 = arith.constant 112 : index
    %138 = vector.load %arg4[%c0_152, %c0_153, %c112_154] : memref<1x8x256xf32, #tpu.memory_space<vmem>>, vector<1x8x16xf32>
    %139 = vector.shape_cast %138 : vector<1x8x16xf32> to vector<8x16xf32>
    %140 = vector.shape_cast %137 : vector<8x16xf32> to vector<1x8x16xf32>
    tpu.vector_store %arg4[%c0_152, %c0_153, %c112_154], %140 {strides = array<i32>} : memref<1x8x256xf32, #tpu.memory_space<vmem>>, vector<1x8x16xf32>,
    %141 = vector.extract_strided_slice %108 {offsets = [0, 160], sizes = [8, 16], strides = [1, 1]} : vector<8x320xf32> to vector<8x16xf32>
    %c0_155 = arith.constant 0 : index
    %c0_156 = arith.constant 0 : index
    %c128_157 = arith.constant 128 : index
    %142 = vector.load %arg4[%c0_155, %c0_156, %c128_157] : memref<1x8x256xf32, #tpu.memory_space<vmem>>, vector<1x8x16xf32>
    %143 = vector.shape_cast %142 : vector<1x8x16xf32> to vector<8x16xf32>
    %144 = vector.shape_cast %141 : vector<8x16xf32> to vector<1x8x16xf32>
    tpu.vector_store %arg4[%c0_155, %c0_156, %c128_157], %144 {strides = array<i32>} : memref<1x8x256xf32, #tpu.memory_space<vmem>>, vector<1x8x16xf32>,
    %145 = vector.extract_strided_slice %108 {offsets = [0, 180], sizes = [8, 16], strides = [1, 1]} : vector<8x320xf32> to vector<8x16xf32>
    %c0_158 = arith.constant 0 : index
    %c0_159 = arith.constant 0 : index
    %c144_160 = arith.constant 144 : index
    %146 = vector.load %arg4[%c0_158, %c0_159, %c144_160] : memref<1x8x256xf32, #tpu.memory_space<vmem>>, vector<1x8x16xf32>
    %147 = vector.shape_cast %146 : vector<1x8x16xf32> to vector<8x16xf32>
    %148 = vector.shape_cast %145 : vector<8x16xf32> to vector<1x8x16xf32>
    tpu.vector_store %arg4[%c0_158, %c0_159, %c144_160], %148 {strides = array<i32>} : memref<1x8x256xf32, #tpu.memory_space<vmem>>, vector<1x8x16xf32>,
    %149 = vector.extract_strided_slice %108 {offsets = [0, 200], sizes = [8, 16], strides = [1, 1]} : vector<8x320xf32> to vector<8x16xf32>
    %c0_161 = arith.constant 0 : index
    %c0_162 = arith.constant 0 : index
    %c160_163 = arith.constant 160 : index
    %150 = vector.load %arg4[%c0_161, %c0_162, %c160_163] : memref<1x8x256xf32, #tpu.memory_space<vmem>>, vector<1x8x16xf32>
    %151 = vector.shape_cast %150 : vector<1x8x16xf32> to vector<8x16xf32>
    %152 = vector.shape_cast %149 : vector<8x16xf32> to vector<1x8x16xf32>
    tpu.vector_store %arg4[%c0_161, %c0_162, %c160_163], %152 {strides = array<i32>} : memref<1x8x256xf32, #tpu.memory_space<vmem>>, vector<1x8x16xf32>,
    %153 = vector.extract_strided_slice %108 {offsets = [0, 220], sizes = [8, 16], strides = [1, 1]} : vector<8x320xf32> to vector<8x16xf32>
    %c0_164 = arith.constant 0 : index
    %c0_165 = arith.constant 0 : index
    %c176_166 = arith.constant 176 : index
    %154 = vector.load %arg4[%c0_164, %c0_165, %c176_166] : memref<1x8x256xf32, #tpu.memory_space<vmem>>, vector<1x8x16xf32>
    %155 = vector.shape_cast %154 : vector<1x8x16xf32> to vector<8x16xf32>
    %156 = vector.shape_cast %153 : vector<8x16xf32> to vector<1x8x16xf32>
    tpu.vector_store %arg4[%c0_164, %c0_165, %c176_166], %156 {strides = array<i32>} : memref<1x8x256xf32, #tpu.memory_space<vmem>>, vector<1x8x16xf32>,
    %157 = vector.extract_strided_slice %108 {offsets = [0, 240], sizes = [8, 16], strides = [1, 1]} : vector<8x320xf32> to vector<8x16xf32>
    %c0_167 = arith.constant 0 : index
    %c0_168 = arith.constant 0 : index
    %c192_169 = arith.constant 192 : index
    %158 = vector.load %arg4[%c0_167, %c0_168, %c192_169] : memref<1x8x256xf32, #tpu.memory_space<vmem>>, vector<1x8x16xf32>
    %159 = vector.shape_cast %158 : vector<1x8x16xf32> to vector<8x16xf32>
    %160 = vector.shape_cast %157 : vector<8x16xf32> to vector<1x8x16xf32>
    tpu.vector_store %arg4[%c0_167, %c0_168, %c192_169], %160 {strides = array<i32>} : memref<1x8x256xf32, #tpu.memory_space<vmem>>, vector<1x8x16xf32>,
    %161 = vector.extract_strided_slice %108 {offsets = [0, 260], sizes = [8, 16], strides = [1, 1]} : vector<8x320xf32> to vector<8x16xf32>
    %c0_170 = arith.constant 0 : index
    %c0_171 = arith.constant 0 : index
    %c208_172 = arith.constant 208 : index
    %162 = vector.load %arg4[%c0_170, %c0_171, %c208_172] : memref<1x8x256xf32, #tpu.memory_space<vmem>>, vector<1x8x16xf32>
    %163 = vector.shape_cast %162 : vector<1x8x16xf32> to vector<8x16xf32>
    %164 = vector.shape_cast %161 : vector<8x16xf32> to vector<1x8x16xf32>
    tpu.vector_store %arg4[%c0_170, %c0_171, %c208_172], %164 {strides = array<i32>} : memref<1x8x256xf32, #tpu.memory_space<vmem>>, vector<1x8x16xf32>,
    %165 = vector.extract_strided_slice %108 {offsets = [0, 280], sizes = [8, 16], strides = [1, 1]} : vector<8x320xf32> to vector<8x16xf32>
    %c0_173 = arith.constant 0 : index
    %c0_174 = arith.constant 0 : index
    %c224_175 = arith.constant 224 : index
    %166 = vector.load %arg4[%c0_173, %c0_174, %c224_175] : memref<1x8x256xf32, #tpu.memory_space<vmem>>, vector<1x8x16xf32>
    %167 = vector.shape_cast %166 : vector<1x8x16xf32> to vector<8x16xf32>
    %168 = vector.shape_cast %165 : vector<8x16xf32> to vector<1x8x16xf32>
    tpu.vector_store %arg4[%c0_173, %c0_174, %c224_175], %168 {strides = array<i32>} : memref<1x8x256xf32, #tpu.memory_space<vmem>>, vector<1x8x16xf32>,
    %169 = vector.extract_strided_slice %108 {offsets = [0, 300], sizes = [8, 16], strides = [1, 1]} : vector<8x320xf32> to vector<8x16xf32>
    %c0_176 = arith.constant 0 : index
    %c0_177 = arith.constant 0 : index
    %c240_178 = arith.constant 240 : index
    %170 = vector.load %arg4[%c0_176, %c0_177, %c240_178] : memref<1x8x256xf32, #tpu.memory_space<vmem>>, vector<1x8x16xf32>
    %171 = vector.shape_cast %170 : vector<1x8x16xf32> to vector<8x16xf32>
    %172 = vector.shape_cast %169 : vector<8x16xf32> to vector<1x8x16xf32>
    tpu.vector_store %arg4[%c0_176, %c0_177, %c240_178], %172 {strides = array<i32>} : memref<1x8x256xf32, #tpu.memory_space<vmem>>, vector<1x8x16xf32>,
    %c0_179 = arith.constant 0 : index
    %c0_180 = arith.constant 0 : index
    %c0_181 = arith.constant 0 : index
    %173 = vector.load %arg4[%c0_179, %c0_180, %c0_181] : memref<1x8x256xf32, #tpu.memory_space<vmem>>, vector<1x8x256xf32>
    %174 = vector.shape_cast %173 : vector<1x8x256xf32> to vector<8x256xf32>
    %cst_182 = arith.constant dense<0.000000e+00> : vector<8xf32>
    %175 = vector.multi_reduction <add>, %174, %cst_182 [1] : vector<8x256xf32> to vector<8xf32>
    %176 = vector.shape_cast %175 : vector<8xf32> to vector<8x1xf32>
    %c0_183 = arith.constant 0 : index
    %c0_184 = arith.constant 0 : index
    %c0_185 = arith.constant 0 : index
    %177 = vector.load %arg5[%c0_183, %c0_184, %c0_185] : memref<1x8x1xf32, #tpu.memory_space<vmem>>, vector<1x8x1xf32>
    %178 = vector.shape_cast %177 : vector<1x8x1xf32> to vector<8x1xf32>
    %179 = vector.shape_cast %176 : vector<8x1xf32> to vector<1x8x1xf32>
    tpu.vector_store %arg5[%c0_183, %c0_184, %c0_185], %179 {strides = array<i32>} : memref<1x8x1xf32, #tpu.memory_space<vmem>>, vector<1x8x1xf32>,
    %180 = arith.mulf %174, %174 : vector<8x256xf32>
    %cst_186 = arith.constant dense<0.000000e+00> : vector<8xf32>
    %181 = vector.multi_reduction <add>, %180, %cst_186 [1] : vector<8x256xf32> to vector<8xf32>
    %182 = vector.shape_cast %181 : vector<8xf32> to vector<8x1xf32>
    %c0_187 = arith.constant 0 : index
    %c0_188 = arith.constant 0 : index
    %c0_189 = arith.constant 0 : index
    %183 = vector.load %arg6[%c0_187, %c0_188, %c0_189] : memref<1x8x1xf32, #tpu.memory_space<vmem>>, vector<1x8x1xf32>
    %184 = vector.shape_cast %183 : vector<1x8x1xf32> to vector<8x1xf32>
    %185 = vector.shape_cast %182 : vector<8x1xf32> to vector<1x8x1xf32>
    tpu.vector_store %arg6[%c0_187, %c0_188, %c0_189], %185 {strides = array<i32>} : memref<1x8x1xf32, #tpu.memory_space<vmem>>, vector<1x8x1xf32>,
    return
  }
  func.func @transform_0(%arg0: i32) -> (i32, i32, i32) {
    %c0_i32 = arith.constant 0 : i32
    %c0_i32_0 = arith.constant 0 : i32
    %c0_i32_1 = arith.constant 0 : i32
    return %arg0, %c0_i32, %c0_i32_0 : i32, i32, i32
  }
  func.func @transform_1(%arg0: i32) -> (i32, i32) {
    %c0_i32 = arith.constant 0 : i32
    %c0_i32_0 = arith.constant 0 : i32
    %c0_i32_1 = arith.constant 0 : i32
    return %c0_i32, %c0_i32_0 : i32, i32
  }
  func.func @transform_2(%arg0: i32) -> (i32, i32) {
    %c0_i32 = arith.constant 0 : i32
    %c0_i32_0 = arith.constant 0 : i32
    %c0_i32_1 = arith.constant 0 : i32
    return %c0_i32, %c0_i32_0 : i32, i32
  }
  func.func @transform_3(%arg0: i32) -> (i32, i32, i32) {
    %c0_i32 = arith.constant 0 : i32
    %c0_i32_0 = arith.constant 0 : i32
    %c0_i32_1 = arith.constant 0 : i32
    return %arg0, %c0_i32, %c0_i32_0 : i32, i32, i32
  }
  func.func @transform_4(%arg0: i32) -> (i32, i32, i32) {
    %c0_i32 = arith.constant 0 : i32
    %c0_i32_0 = arith.constant 0 : i32
    %c0_i32_1 = arith.constant 0 : i32
    return %arg0, %c0_i32, %c0_i32_0 : i32, i32, i32
  }
  func.func @transform_5(%arg0: i32) -> (i32, i32, i32) {
    %c0_i32 = arith.constant 0 : i32
    %c0_i32_0 = arith.constant 0 : i32
    %c0_i32_1 = arith.constant 0 : i32
    return %arg0, %c0_i32, %c0_i32_0 : i32, i32, i32
  }
}

</mosaic_0001>

<llo_original>
// kernel: cbn2d.3
$region0: #{cbn2d.3}
  #allocation0 [shape = 'u32[]', space=smem, size = 0x4, offset = 0x4, fixed_abs, tag = 'smem constant byte address 0x4 - core index']
  #allocation1 [shape = 'u32[144,128]{1,0:T(1,128)}', space=vmem, size = 0x12000, scoped, tag = 'internal scratch']
  %s0 = inlined_call_operand.vmem [shape: f32[2,8,256], index: 0, kind: input, shape index: {}]
  %s1 = inlined_call_operand.vmem [shape: f32[2,8,1], index: 1, kind: input, shape index: {}]
  %s2 = inlined_call_operand.vmem [shape: f32[2,8,1], index: 2, kind: input, shape index: {}]
  %s3 = inlined_call_operand.vmem [shape: f32[8,1], index: 3, kind: input, shape index: {}]
  %s4 = inlined_call_operand.vmem [shape: f32[8,1], index: 4, kind: input, shape index: {}]
  %s5 = inlined_call_operand.vmem [shape: f32[2,8,256], index: 5, kind: output, shape index: {}]
  %s6 = sld [smem:[#allocation0]]
  $region53: #{cbn2d.3} parent=0
    _
  %s8 = ssub.s32 1, %s6
  %s9 = scalar_select 0, %s8, %s6
  loop: start=0, step=1, limit=4
  $region2: #{cbn2d.3} parent=0 // loop_pre_header
    _
  $region3: #{cbn2d.3} parent=0 // loop_header
    %s11 = sphi 0, %s15
    %p12 = scmp.ge.s32.totalorder %s11, 4
    %s21 = sphi 0, %s23
    %s24 = sphi 0, %s21
    %s25 = sphi 0, %s24
    %s41 = sphi 0, %s25
    %s45 = sphi 0, %s45
    %s47 = sphi 0, %s45
    %s48 = sphi 0, %s47
    %s62 = sphi 0, %s48
    %s66 = sphi 0, %s66
    %s68 = sphi 0, %s66
    %s69 = sphi 0, %s68
    %s83 = sphi 0, %s69
    %s87 = sphi 0, %s87
    %s89 = sphi 0, %s87
    %s90 = sphi 0, %s89
    %s104 = sphi 0, %s90
    %s108 = sphi 0, %s108
    %s110 = sphi 0, %s108
    %s111 = sphi 0, %s110
    %s125 = sphi 0, %s111
    %s131 = sphi 0, %s133
    %s134 = sphi 0, %s131
    %s135 = sphi 0, %s134
    %s151 = sphi 0, %s135
  $region4: #{cbn2d.3} parent=0 // loop_header_branch
    %14 = sbr.rel (%p12) target = $region8
  $region5: #{cbn2d.3} parent=0 // loop_body
    %s16 = ssub.s32 %s11, 1
    %s17 = ssub.s32 %s11, 2
    %s18 = sadd.s32 %s11, 1
    %s19 = ssub.s32 %s11, %s18
    %p20 = scmp.eq.s32.totalorder %s19, 0
    %s22 = sadd.s32 %s21, 1
    %s23 = scalar_select %p20, %s21, %s22
    %p26 = pneg %p20
    %p27 = scmp.eq.s32.totalorder %s11, 1
    %p28 = por %p26, %p27
    %p29 = scmp.ne.s32.totalorder %s21, %s24
    %p30 = scmp.eq.s32.totalorder %s11, 0
    %p31 = por %p29, %p30
    %p32 = scmp.ne.s32.totalorder %s21, %s24
    %p33 = scmp.eq.s32.totalorder %s16, 1
    %p34 = por %p32, %p33
    %p35 = scmp.ne.s32.totalorder %s24, %s25
    %p36 = scmp.eq.s32.totalorder %s16, 0
    %p37 = por %p35, %p36
    %p38 = scmp.ne.s32.totalorder %s24, %s25
    %p39 = scmp.eq.s32.totalorder %s17, 1
    %p40 = por %p38, %p39
    %p42 = scmp.ne.s32.totalorder %s25, %s41
    %p43 = scmp.eq.s32.totalorder %s17, 0
    %p44 = por %p42, %p43
    %s46 = sadd.s32 %s45, 1
    %p49 = scmp.eq.s32.totalorder %s11, 1
    %p50 = scmp.ne.s32.totalorder %s45, %s47
    %p51 = scmp.eq.s32.totalorder %s11, 0
    %p52 = por %p50, %p51
    %p53 = scmp.ne.s32.totalorder %s45, %s47
    %p54 = scmp.eq.s32.totalorder %s16, 1
    %p55 = por %p53, %p54
    %p56 = scmp.ne.s32.totalorder %s47, %s48
    %p57 = scmp.eq.s32.totalorder %s16, 0
    %p58 = por %p56, %p57
    %p59 = scmp.ne.s32.totalorder %s47, %s48
    %p60 = scmp.eq.s32.totalorder %s17, 1
    %p61 = por %p59, %p60
    %p63 = scmp.ne.s32.totalorder %s48, %s62
    %p64 = scmp.eq.s32.totalorder %s17, 0
    %p65 = por %p63, %p64
    %s67 = sadd.s32 %s66, 1
    %p70 = scmp.eq.s32.totalorder %s11, 1
    %p71 = scmp.ne.s32.totalorder %s66, %s68
    %p72 = scmp.eq.s32.totalorder %s11, 0
    %p73 = por %p71, %p72
    %p74 = scmp.ne.s32.totalorder %s66, %s68
    %p75 = scmp.eq.s32.totalorder %s16, 1
    %p76 = por %p74, %p75
    %p77 = scmp.ne.s32.totalorder %s68, %s69
    %p78 = scmp.eq.s32.totalorder %s16, 0
    %p79 = por %p77, %p78
    %p80 = scmp.ne.s32.totalorder %s68, %s69
    %p81 = scmp.eq.s32.totalorder %s17, 1
    %p82 = por %p80, %p81
    %p84 = scmp.ne.s32.totalorder %s69, %s83
    %p85 = scmp.eq.s32.totalorder %s17, 0
    %p86 = por %p84, %p85
    %s88 = sadd.s32 %s87, 1
    %p91 = scmp.eq.s32.totalorder %s11, 1
    %p92 = scmp.ne.s32.totalorder %s87, %s89
    %p93 = scmp.eq.s32.totalorder %s11, 0
    %p94 = por %p92, %p93
    %p95 = scmp.ne.s32.totalorder %s87, %s89
    %p96 = scmp.eq.s32.totalorder %s16, 1
    %p97 = por %p95, %p96
    %p98 = scmp.ne.s32.totalorder %s89, %s90
    %p99 = scmp.eq.s32.totalorder %s16, 0
    %p100 = por %p98, %p99
    %p101 = scmp.ne.s32.totalorder %s89, %s90
    %p102 = scmp.eq.s32.totalorder %s17, 1
    %p103 = por %p101, %p102
    %p105 = scmp.ne.s32.totalorder %s90, %s104
    %p106 = scmp.eq.s32.totalorder %s17, 0
    %p107 = por %p105, %p106
    %s109 = sadd.s32 %s108, 1
    %p112 = scmp.eq.s32.totalorder %s11, 1
    %p113 = scmp.ne.s32.totalorder %s108, %s110
    %p114 = scmp.eq.s32.totalorder %s11, 0
    %p115 = por %p113, %p114
    %p116 = scmp.ne.s32.totalorder %s108, %s110
    %p117 = scmp.eq.s32.totalorder %s16, 1
    %p118 = por %p116, %p117
    %p119 = scmp.ne.s32.totalorder %s110, %s111
    %p120 = scmp.eq.s32.totalorder %s16, 0
    %p121 = por %p119, %p120
    %p122 = scmp.ne.s32.totalorder %s110, %s111
    %p123 = scmp.eq.s32.totalorder %s17, 1
    %p124 = por %p122, %p123
    %p126 = scmp.ne.s32.totalorder %s111, %s125
    %p127 = scmp.eq.s32.totalorder %s17, 0
    %p128 = por %p126, %p127
    %s129 = ssub.s32 %s11, %s18
    %p130 = scmp.eq.s32.totalorder %s129, 0
    %s132 = sadd.s32 %s131, 1
    %s133 = scalar_select %p130, %s131, %s132
    %p136 = pneg %p130
    %p137 = scmp.eq.s32.totalorder %s11, 1
    %p138 = por %p136, %p137
    %p139 = scmp.ne.s32.totalorder %s131, %s134
    %p140 = scmp.eq.s32.totalorder %s11, 0
    %p141 = por %p139, %p140
    %p142 = scmp.ne.s32.totalorder %s131, %s134
    %p143 = scmp.eq.s32.totalorder %s16, 1
    %p144 = por %p142, %p143
    %p145 = scmp.ne.s32.totalorder %s134, %s135
    %p146 = scmp.eq.s32.totalorder %s16, 0
    %p147 = por %p145, %p146
    %p148 = scmp.ne.s32.totalorder %s134, %s135
    %p149 = scmp.eq.s32.totalorder %s17, 1
    %p150 = por %p148, %p149
    %p152 = scmp.ne.s32.totalorder %s135, %s151
    %p153 = scmp.eq.s32.totalorder %s17, 0
    %p154 = por %p152, %p153
    %p155 = scmp.le.s32.totalorder 1, %s11
    %p156 = scmp.lt.s32.totalorder %s11, 3
    %p157 = pnand %p155, %p156
    %p158 = pneg %p157
    // Predicated region
    $region9: #{cbn2d.3} parent=5 // pred_check
      _
    $region10: #{cbn2d.3} parent=5 // pred_check_branch
      %160 = sbr.rel (%p157) target = $region12
    $region11: #{cbn2d.3} parent=5 // pred_region
      %s161 = ssub.s32 %s11, 1
      // Predicated region
      $region13: #{cbn2d.3} parent=11 // pred_check
        %p162 = pneg %p58
      $region14: #{cbn2d.3} parent=11 // pred_check_branch
        %164 = sbr.rel (%p162) target = $region16
      $region15: #{cbn2d.3} parent=11 // pred_region
        _
      $region16: #{cbn2d.3} parent=11 // pred_fallthru
        _
      // Predicated region
      $region17: #{cbn2d.3} parent=11 // pred_check
        %p165 = pneg %p79
      $region18: #{cbn2d.3} parent=11 // pred_check_branch
        %167 = sbr.rel (%p165) target = $region20
      $region19: #{cbn2d.3} parent=11 // pred_region
        _
      $region20: #{cbn2d.3} parent=11 // pred_fallthru
        _
      // Predicated region
      $region21: #{cbn2d.3} parent=11 // pred_check
        %p168 = pneg %p100
      $region22: #{cbn2d.3} parent=11 // pred_check_branch
        %170 = sbr.rel (%p168) target = $region24
      $region23: #{cbn2d.3} parent=11 // pred_region
        _
      $region24: #{cbn2d.3} parent=11 // pred_fallthru
        _
      // Predicated region
      $region25: #{cbn2d.3} parent=11 // pred_check
        %p171 = pneg %p121
      $region26: #{cbn2d.3} parent=11 // pred_check_branch
        %173 = sbr.rel (%p171) target = $region28
      $region27: #{cbn2d.3} parent=11 // pred_region
        _
      $region28: #{cbn2d.3} parent=11 // pred_fallthru
        _
    $region12: #{cbn2d.3} parent=5 // pred_fallthru
      _
    %p174 = scmp.lt.s32.totalorder %s11, 2
    // Predicated region
    $region29: #{cbn2d.3} parent=5 // pred_check
      %p175 = pneg %p174
    $region30: #{cbn2d.3} parent=5 // pred_check_branch
      %177 = sbr.rel (%p175) target = $region32
    $region31: #{cbn2d.3} parent=5 // pred_region
      // Predicated region
      $region33: #{cbn2d.3} parent=31 // pred_check
        %p178 = pneg %p31
      $region34: #{cbn2d.3} parent=31 // pred_check_branch
        %180 = sbr.rel (%p178) target = $region36
      $region35: #{cbn2d.3} parent=31 // pred_region
        %p181 = scmp.lt.s32.totalorder %s11, 1
        %s182 = scalar_select %p181, %s11, 1
        %s183 = smul.addr %s182, 2
        %s184 = smul.addr %s183, 8
        %s185 = scalar_lea.vmem %s0, %s184
      $region36: #{cbn2d.3} parent=31 // pred_fallthru
        _
    $region32: #{cbn2d.3} parent=5 // pred_fallthru
      _
    %p186 = scmp.le.s32.totalorder 1, %s11
    %p187 = scmp.lt.s32.totalorder %s11, 3
    %p188 = pnand %p186, %p187
    %p189 = pneg %p188
    // Predicated region
    $region37: #{cbn2d.3} parent=5 // pred_check
      _
    $region38: #{cbn2d.3} parent=5 // pred_check_branch
      %191 = sbr.rel (%p188) target = $region40
    $region39: #{cbn2d.3} parent=5 // pred_region
      %s192 = ssub.s32 %s11, 1
      %p193 = scmp.lt.s32.totalorder %s16, 1
      %s194 = scalar_select %p193, %s16, 1
      %s195 = smul.addr %s194, 2
      %s196 = smul.addr %s195, 8
      %s197 = scalar_lea.vmem %s0, %s196
      %p198 = pneg %p37
      %p199 = pneg %p34
      %p200 = pneg %p58
      %p201 = pneg %p55
      %p202 = pneg %p79
      %p203 = pneg %p76
      %p204 = pneg %p100
      %p205 = pneg %p97
      %p206 = pneg %p121
      %p207 = pneg %p118
      %p208 = pneg %p147
      %p209 = pneg %p144
      %p210 = scmp.lt.s32.totalorder %s16, 1
      %s211 = scalar_select %p210, %s16, 1
      %s212 = smul.addr %s211, 2
      %s213 = smul.addr %s212, 8
      %s214 = scalar_lea.vmem %s5, %s213
      %p215 = scmp.lt.s32.totalorder %s16, 1
      %s216 = scalar_select %p215, %s16, 1
      %s217 = smul.addr %s216, 2
      %s218 = smul.addr %s217, 8
      %s219 = scalar_lea.vmem %s0, %s218
      %p220 = scmp.lt.s32.totalorder %s16, 1
      %s221 = scalar_select %p220, %s16, 1
      %s222 = smul.addr %s221, 2
      %s223 = smul.addr %s222, 8
      %s224 = scalar_lea.vmem %s5, %s223
      %v225 = vld [vmem:[%s1] sm:$0xff]
      %v226 = vld [vmem:[%s1 + $0x8] sm:$0xff]
      %vm227 = vcmask 7168
      %v228 = vsel %vm227, %v225, 0.0
      %v229 = vsel %vm227, %v226, 0.0
      %v230 = vadd.f32 %v228, %v229
      %v231 = vmul.f32 %v230, 0.001953125
      %v232 = vld [vmem:[%s2] sm:$0xff]
      %v233 = vld [vmem:[%s2 + $0x8] sm:$0xff]
      %v234 = vsel %vm227, %v232, 0.0
      %v235 = vsel %vm227, %v233, 0.0
      %v236 = vadd.f32 %v234, %v235
      %v237 = vmul.f32 %v236, 0.001953125
      %v238 = vmul.f32 %v231, %v231
      %v239 = vsub.f32 %v237, %v238
      %v240 = vmax.f32 %v239, 0.0
      %v241 = vadd.f32 %v240, 1e-05
      %v242 = vrsqrt.pop %v241
      %v243 = vld [vmem:[%s3] sm:$0xff]
      %v244 = vmul.f32 %v243, %v242
      %v245 = vld [vmem:[%s4] sm:$0xff]
      %v246 = vmul.f32 %v231, %v244
      %v247 = vsub.f32 %v245, %v246
      %v248 = vld [vmem:[%s219] sm:$0xff]
      %v249 = vld [vmem:[%s219 + $0x8] sm:$0xff]
      %251 = vset.pattern.permute.xlu0 0
      %252 = vperm.xlu0 %251, %v244
      %v253 = vpop.permute.xlu0 %252
      %v255 = vmul.f32 %v248, %v253
      %v256 = vmul.f32 %v249, %v253
      %258 = vset.pattern.permute.xlu0 0
      %259 = vperm.xlu0 %258, %v247
      %v260 = vpop.permute.xlu0 %259
      %v262 = vadd.f32 %v255, %v260
      %v263 = vadd.f32 %v256, %v260
      %v264 = vmax.f32 %v262, 0.0
      %v265 = vmax.f32 %v263, 0.0
      %266 = vst [vmem:[%s224] sm:$0xff] %v264
      %267 = vst [vmem:[%s224 + $0x8] sm:$0xff] %v265
      %p268 = scmp.lt.s32.totalorder %s16, 1
      %s269 = scalar_select %p268, %s16, 1
      %s270 = smul.addr %s269, 2
      %s271 = smul.addr %s270, 8
      %s272 = scalar_lea.vmem %s5, %s271
      // Predicated region
      $region41: #{cbn2d.3} parent=39 // pred_check
        %p273 = pneg %p144
      $region42: #{cbn2d.3} parent=39 // pred_check_branch
        %275 = sbr.rel (%p273) target = $region44
      $region43: #{cbn2d.3} parent=39 // pred_region
        _
      $region44: #{cbn2d.3} parent=39 // pred_fallthru
        _
    $region40: #{cbn2d.3} parent=5 // pred_fallthru
      _
    %p276 = scmp.le.s32.totalorder 2, %s11
    // Predicated region
    $region45: #{cbn2d.3} parent=5 // pred_check
      %p277 = pneg %p276
    $region46: #{cbn2d.3} parent=5 // pred_check_branch
      %279 = sbr.rel (%p277) target = $region48
    $region47: #{cbn2d.3} parent=5 // pred_region
      %s280 = ssub.s32 %s11, 2
      // Predicated region
      $region49: #{cbn2d.3} parent=47 // pred_check
        %p281 = pneg %p150
      $region50: #{cbn2d.3} parent=47 // pred_check_branch
        %283 = sbr.rel (%p281) target = $region52
      $region51: #{cbn2d.3} parent=47 // pred_region
        %p284 = scmp.lt.s32.totalorder %s17, 1
        %s285 = scalar_select %p284, %s17, 1
        %s286 = smul.addr %s285, 2
        %s287 = smul.addr %s286, 8
        %s288 = scalar_lea.vmem %s5, %s287
      $region52: #{cbn2d.3} parent=47 // pred_fallthru
        _
    $region48: #{cbn2d.3} parent=5 // pred_fallthru
      _
  $region6: #{cbn2d.3} parent=0 // loop_footer
    %s15 = sadd.s32 1, %s11
  $region7: #{cbn2d.3} parent=0 // loop_footer_branch
    %10 = sbr.rel target = $region3
  $region8: #{cbn2d.3} parent=0 // loop_exit
    _

// kernel: cbn2d.2
$region0: #{cbn2d.2}
  #allocation0 [shape = 'u32[]', space=smem, size = 0x4, offset = 0x4, fixed_abs, tag = 'smem constant byte address 0x4 - core index']
  #allocation1 [shape = 'u32[144,128]{1,0:T(1,128)}', space=vmem, size = 0x12000, scoped, tag = 'internal scratch']
  #allocation2 [shape = 'f32[4,404]{1,0:T(4,128)}', space=vmem, size = 0x2000, scoped, tag = 'scratch operand']
  #allocation3 [shape = 'f32[256,320]{1,0:T(8,128)}', space=vmem, size = 0x60000, scoped, tag = 'scratch operand']
  %s0 = inlined_call_operand.vmem [shape: f32[2,4,256], index: 0, kind: input, shape index: {}]
  %s1 = inlined_call_operand.vmem [shape: bf16[8,256], index: 1, kind: input, shape index: {}]
  %s2 = inlined_call_operand.vmem [shape: f32[8,1], index: 2, kind: input, shape index: {}]
  %s3 = inlined_call_operand.vmem [shape: f32[2,8,256], index: 3, kind: output, shape index: {0}]
  %s4 = inlined_call_operand.vmem [shape: f32[2,8,1], index: 4, kind: output, shape index: {1}]
  %s5 = inlined_call_operand.vmem [shape: f32[2,8,1], index: 5, kind: output, shape index: {2}]
  %6 = xla_tuple %s3, %s4, %s5
  %s7 = sld [smem:[#allocation0]]
  $region61: #{cbn2d.2} parent=0
    _
  %s9 = ssub.s32 1, %s7
  %s10 = scalar_select 0, %s9, %s7
  loop: start=0, step=1, limit=4
  $region2: #{cbn2d.2} parent=0 // loop_pre_header
    _
  $region3: #{cbn2d.2} parent=0 // loop_header
    %s12 = sphi 0, %s16
    %p13 = scmp.ge.s32.totalorder %s12, 4
    %s22 = sphi 0, %s24
    %s25 = sphi 0, %s22
    %s26 = sphi 0, %s25
    %s42 = sphi 0, %s26
    %s46 = sphi 0, %s46
    %s48 = sphi 0, %s46
    %s49 = sphi 0, %s48
    %s63 = sphi 0, %s49
    %s67 = sphi 0, %s67
    %s69 = sphi 0, %s67
    %s70 = sphi 0, %s69
    %s84 = sphi 0, %s70
    %s90 = sphi 0, %s92
    %s93 = sphi 0, %s90
    %s94 = sphi 0, %s93
    %s110 = sphi 0, %s94
    %s116 = sphi 0, %s118
    %s119 = sphi 0, %s116
    %s120 = sphi 0, %s119
    %s136 = sphi 0, %s120
    %s142 = sphi 0, %s144
    %s145 = sphi 0, %s142
    %s146 = sphi 0, %s145
    %s162 = sphi 0, %s146
  $region4: #{cbn2d.2} parent=0 // loop_header_branch
    %15 = sbr.rel (%p13) target = $region8
  $region5: #{cbn2d.2} parent=0 // loop_body
    %s17 = ssub.s32 %s12, 1
    %s18 = ssub.s32 %s12, 2
    %s19 = sadd.s32 %s12, 1
    %s20 = ssub.s32 %s12, %s19
    %p21 = scmp.eq.s32.totalorder %s20, 0
    %s23 = sadd.s32 %s22, 1
    %s24 = scalar_select %p21, %s22, %s23
    %p27 = pneg %p21
    %p28 = scmp.eq.s32.totalorder %s12, 1
    %p29 = por %p27, %p28
    %p30 = scmp.ne.s32.totalorder %s22, %s25
    %p31 = scmp.eq.s32.totalorder %s12, 0
    %p32 = por %p30, %p31
    %p33 = scmp.ne.s32.totalorder %s22, %s25
    %p34 = scmp.eq.s32.totalorder %s17, 1
    %p35 = por %p33, %p34
    %p36 = scmp.ne.s32.totalorder %s25, %s26
    %p37 = scmp.eq.s32.totalorder %s17, 0
    %p38 = por %p36, %p37
    %p39 = scmp.ne.s32.totalorder %s25, %s26
    %p40 = scmp.eq.s32.totalorder %s18, 1
    %p41 = por %p39, %p40
    %p43 = scmp.ne.s32.totalorder %s26, %s42
    %p44 = scmp.eq.s32.totalorder %s18, 0
    %p45 = por %p43, %p44
    %s47 = sadd.s32 %s46, 1
    %p50 = scmp.eq.s32.totalorder %s12, 1
    %p51 = scmp.ne.s32.totalorder %s46, %s48
    %p52 = scmp.eq.s32.totalorder %s12, 0
    %p53 = por %p51, %p52
    %p54 = scmp.ne.s32.totalorder %s46, %s48
    %p55 = scmp.eq.s32.totalorder %s17, 1
    %p56 = por %p54, %p55
    %p57 = scmp.ne.s32.totalorder %s48, %s49
    %p58 = scmp.eq.s32.totalorder %s17, 0
    %p59 = por %p57, %p58
    %p60 = scmp.ne.s32.totalorder %s48, %s49
    %p61 = scmp.eq.s32.totalorder %s18, 1
    %p62 = por %p60, %p61
    %p64 = scmp.ne.s32.totalorder %s49, %s63
    %p65 = scmp.eq.s32.totalorder %s18, 0
    %p66 = por %p64, %p65
    %s68 = sadd.s32 %s67, 1
    %p71 = scmp.eq.s32.totalorder %s12, 1
    %p72 = scmp.ne.s32.totalorder %s67, %s69
    %p73 = scmp.eq.s32.totalorder %s12, 0
    %p74 = por %p72, %p73
    %p75 = scmp.ne.s32.totalorder %s67, %s69
    %p76 = scmp.eq.s32.totalorder %s17, 1
    %p77 = por %p75, %p76
    %p78 = scmp.ne.s32.totalorder %s69, %s70
    %p79 = scmp.eq.s32.totalorder %s17, 0
    %p80 = por %p78, %p79
    %p81 = scmp.ne.s32.totalorder %s69, %s70
    %p82 = scmp.eq.s32.totalorder %s18, 1
    %p83 = por %p81, %p82
    %p85 = scmp.ne.s32.totalorder %s70, %s84
    %p86 = scmp.eq.s32.totalorder %s18, 0
    %p87 = por %p85, %p86
    %s88 = ssub.s32 %s12, %s19
    %p89 = scmp.eq.s32.totalorder %s88, 0
    %s91 = sadd.s32 %s90, 1
    %s92 = scalar_select %p89, %s90, %s91
    %p95 = pneg %p89
    %p96 = scmp.eq.s32.totalorder %s12, 1
    %p97 = por %p95, %p96
    %p98 = scmp.ne.s32.totalorder %s90, %s93
    %p99 = scmp.eq.s32.totalorder %s12, 0
    %p100 = por %p98, %p99
    %p101 = scmp.ne.s32.totalorder %s90, %s93
    %p102 = scmp.eq.s32.totalorder %s17, 1
    %p103 = por %p101, %p102
    %p104 = scmp.ne.s32.totalorder %s93, %s94
    %p105 = scmp.eq.s32.totalorder %s17, 0
    %p106 = por %p104, %p105
    %p107 = scmp.ne.s32.totalorder %s93, %s94
    %p108 = scmp.eq.s32.totalorder %s18, 1
    %p109 = por %p107, %p108
    %p111 = scmp.ne.s32.totalorder %s94, %s110
    %p112 = scmp.eq.s32.totalorder %s18, 0
    %p113 = por %p111, %p112
    %s114 = ssub.s32 %s12, %s19
    %p115 = scmp.eq.s32.totalorder %s114, 0
    %s117 = sadd.s32 %s116, 1
    %s118 = scalar_select %p115, %s116, %s117
    %p121 = pneg %p115
    %p122 = scmp.eq.s32.totalorder %s12, 1
    %p123 = por %p121, %p122
    %p124 = scmp.ne.s32.totalorder %s116, %s119
    %p125 = scmp.eq.s32.totalorder %s12, 0
    %p126 = por %p124, %p125
    %p127 = scmp.ne.s32.totalorder %s116, %s119
    %p128 = scmp.eq.s32.totalorder %s17, 1
    %p129 = por %p127, %p128
    %p130 = scmp.ne.s32.totalorder %s119, %s120
    %p131 = scmp.eq.s32.totalorder %s17, 0
    %p132 = por %p130, %p131
    %p133 = scmp.ne.s32.totalorder %s119, %s120
    %p134 = scmp.eq.s32.totalorder %s18, 1
    %p135 = por %p133, %p134
    %p137 = scmp.ne.s32.totalorder %s120, %s136
    %p138 = scmp.eq.s32.totalorder %s18, 0
    %p139 = por %p137, %p138
    %s140 = ssub.s32 %s12, %s19
    %p141 = scmp.eq.s32.totalorder %s140, 0
    %s143 = sadd.s32 %s142, 1
    %s144 = scalar_select %p141, %s142, %s143
    %p147 = pneg %p141
    %p148 = scmp.eq.s32.totalorder %s12, 1
    %p149 = por %p147, %p148
    %p150 = scmp.ne.s32.totalorder %s142, %s145
    %p151 = scmp.eq.s32.totalorder %s12, 0
    %p152 = por %p150, %p151
    %p153 = scmp.ne.s32.totalorder %s142, %s145
    %p154 = scmp.eq.s32.totalorder %s17, 1
    %p155 = por %p153, %p154
    %p156 = scmp.ne.s32.totalorder %s145, %s146
    %p157 = scmp.eq.s32.totalorder %s17, 0
    %p158 = por %p156, %p157
    %p159 = scmp.ne.s32.totalorder %s145, %s146
    %p160 = scmp.eq.s32.totalorder %s18, 1
    %p161 = por %p159, %p160
    %p163 = scmp.ne.s32.totalorder %s146, %s162
    %p164 = scmp.eq.s32.totalorder %s18, 0
    %p165 = por %p163, %p164
    %p166 = scmp.le.s32.totalorder 1, %s12
    %p167 = scmp.lt.s32.totalorder %s12, 3
    %p168 = pnand %p166, %p167
    %p169 = pneg %p168
    // Predicated region
    $region9: #{cbn2d.2} parent=5 // pred_check
      _
    $region10: #{cbn2d.2} parent=5 // pred_check_branch
      %171 = sbr.rel (%p168) target = $region12
    $region11: #{cbn2d.2} parent=5 // pred_region
      %s172 = ssub.s32 %s12, 1
      // Predicated region
      $region13: #{cbn2d.2} parent=11 // pred_check
        %p173 = pneg %p59
      $region14: #{cbn2d.2} parent=11 // pred_check_branch
        %175 = sbr.rel (%p173) target = $region16
      $region15: #{cbn2d.2} parent=11 // pred_region
        _
      $region16: #{cbn2d.2} parent=11 // pred_fallthru
        _
      // Predicated region
      $region17: #{cbn2d.2} parent=11 // pred_check
        %p176 = pneg %p80
      $region18: #{cbn2d.2} parent=11 // pred_check_branch
        %178 = sbr.rel (%p176) target = $region20
      $region19: #{cbn2d.2} parent=11 // pred_region
        _
      $region20: #{cbn2d.2} parent=11 // pred_fallthru
        _
    $region12: #{cbn2d.2} parent=5 // pred_fallthru
      _
    %p179 = scmp.lt.s32.totalorder %s12, 2
    // Predicated region
    $region21: #{cbn2d.2} parent=5 // pred_check
      %p180 = pneg %p179
    $region22: #{cbn2d.2} parent=5 // pred_check_branch
      %182 = sbr.rel (%p180) target = $region24
    $region23: #{cbn2d.2} parent=5 // pred_region
      // Predicated region
      $region25: #{cbn2d.2} parent=23 // pred_check
        %p183 = pneg %p32
      $region26: #{cbn2d.2} parent=23 // pred_check_branch
        %185 = sbr.rel (%p183) target = $region28
      $region27: #{cbn2d.2} parent=23 // pred_region
        %p186 = scmp.lt.s32.totalorder %s12, 1
        %s187 = scalar_select %p186, %s12, 1
        %s188 = smul.addr %s187, 2
        %s189 = smul.addr %s188, 4
        %s190 = scalar_lea.vmem %s0, %s189
      $region28: #{cbn2d.2} parent=23 // pred_fallthru
        _
    $region24: #{cbn2d.2} parent=5 // pred_fallthru
      _
    %p191 = scmp.le.s32.totalorder 1, %s12
    %p192 = scmp.lt.s32.totalorder %s12, 3
    %p193 = pnand %p191, %p192
    %p194 = pneg %p193
    // Predicated region
    $region29: #{cbn2d.2} parent=5 // pred_check
      _
    $region30: #{cbn2d.2} parent=5 // pred_check_branch
      %196 = sbr.rel (%p193) target = $region32
    $region31: #{cbn2d.2} parent=5 // pred_region
      %s197 = ssub.s32 %s12, 1
      %p198 = scmp.lt.s32.totalorder %s17, 1
      %s199 = scalar_select %p198, %s17, 1
      %s200 = smul.addr %s199, 2
      %s201 = smul.addr %s200, 4
      %s202 = scalar_lea.vmem %s0, %s201
      %p203 = pneg %p38
      %p204 = pneg %p35
      %p205 = pneg %p59
      %p206 = pneg %p56
      %p207 = pneg %p80
      %p208 = pneg %p77
      %p209 = pneg %p106
      %p210 = pneg %p103
      %p211 = scmp.lt.s32.totalorder %s17, 1
      %s212 = scalar_select %p211, %s17, 1
      %s213 = smul.addr %s212, 2
      %s214 = smul.addr %s213, 8
      %s215 = scalar_lea.vmem %s3, %s214
      %p216 = pneg %p132
      %p217 = pneg %p129
      %p218 = scmp.lt.s32.totalorder %s17, 1
      %s219 = scalar_select %p218, %s17, 1
      %s220 = smul.addr %s219, 8
      %s221 = scalar_lea.vmem %s4, %s220
      %p222 = pneg %p158
      %p223 = pneg %p155
      %p224 = scmp.lt.s32.totalorder %s17, 1
      %s225 = scalar_select %p224, %s17, 1
      %s226 = smul.addr %s225, 8
      %s227 = scalar_lea.vmem %s5, %s226
      %p228 = scmp.lt.s32.totalorder %s17, 1
      %s229 = scalar_select %p228, %s17, 1
      %s230 = smul.addr %s229, 2
      %s231 = smul.addr %s230, 4
      %s232 = scalar_lea.vmem %s0, %s231
      %p233 = scmp.lt.s32.totalorder %s17, 1
      %s234 = scalar_select %p233, %s17, 1
      %s235 = smul.addr %s234, 2
      %s236 = smul.addr %s235, 8
      %s237 = scalar_lea.vmem %s3, %s236
      %p238 = scmp.lt.s32.totalorder %s17, 1
      %s239 = scalar_select %p238, %s17, 1
      %s240 = smul.addr %s239, 8
      %s241 = scalar_lea.vmem %s4, %s240
      %p242 = scmp.lt.s32.totalorder %s17, 1
      %s243 = scalar_select %p242, %s17, 1
      %s244 = smul.addr %s243, 8
      %s245 = scalar_lea.vmem %s5, %s244
      %247 = vst [vmem:[#allocation2] sm:$0xff] 0.0
      %vm248 = vcmask 1043456
      %vm249 = vcmask 162820
      %vm250 = vmor %vm249, %vm248
      %251 = vst.msk [vmem:[#allocation2 + $0x8] sm:$0xff] %vm250, 0.0
      %252 = vst [vmem:[#allocation3] sm:$0xff] 0.0
      %253 = vst [vmem:[#allocation3 + $0x8] sm:$0xff] 0.0
      %vm254 = vcmask 523264
      %255 = vst.msk [vmem:[#allocation3 + $0x10] sm:$0xff] %vm254, 0.0
      %256 = vst [vmem:[#allocation3 + $0x18] sm:$0xff] 0.0
      %257 = vst [vmem:[#allocation3 + $0x20] sm:$0xff] 0.0
      %258 = vst.msk [vmem:[#allocation3 + $0x28] sm:$0xff] %vm254, 0.0
      %259 = vst [vmem:[#allocation3 + $0x30] sm:$0xff] 0.0
      %260 = vst [vmem:[#allocation3 + $0x38] sm:$0xff] 0.0
      %261 = vst.msk [vmem:[#allocation3 + $0x40] sm:$0xff] %vm254, 0.0
      %262 = vst [vmem:[#allocation3 + $0x48] sm:$0xff] 0.0
      %263 = vst [vmem:[#allocation3 + $0x50] sm:$0xff] 0.0
      %264 = vst.msk [vmem:[#allocation3 + $0x58] sm:$0xff] %vm254, 0.0
      %265 = vst [vmem:[#allocation3 + $0x60] sm:$0xff] 0.0
      %266 = vst [vmem:[#allocation3 + $0x68] sm:$0xff] 0.0
      %267 = vst.msk [vmem:[#allocation3 + $0x70] sm:$0xff] %vm254, 0.0
      %268 = vst [vmem:[#allocation3 + $0x78] sm:$0xff] 0.0
      %269 = vst [vmem:[#allocation3 + $0x80] sm:$0xff] 0.0
      %270 = vst.msk [vmem:[#allocation3 + $0x88] sm:$0xff] %vm254, 0.0
      %271 = vst [vmem:[#allocation3 + $0x90] sm:$0xff] 0.0
      %272 = vst [vmem:[#allocation3 + $0x98] sm:$0xff] 0.0
      %273 = vst.msk [vmem:[#allocation3 + $0xa0] sm:$0xff] %vm254, 0.0
      %274 = vst [vmem:[#allocation3 + $0xa8] sm:$0xff] 0.0
      %275 = vst [vmem:[#allocation3 + $0xb0] sm:$0xff] 0.0
      %276 = vst.msk [vmem:[#allocation3 + $0xb8] sm:$0xff] %vm254, 0.0
      %277 = vst [vmem:[#allocation3 + $0xc0] sm:$0xff] 0.0
      %278 = vst [vmem:[#allocation3 + $0xc8] sm:$0xff] 0.0
      %279 = vst.msk [vmem:[#allocation3 + $0xd0] sm:$0xff] %vm254, 0.0
      %280 = vst [vmem:[#allocation3 + $0xd8] sm:$0xff] 0.0
      %281 = vst [vmem:[#allocation3 + $0xe0] sm:$0xff] 0.0
      %282 = vst.msk [vmem:[#allocation3 + $0xe8] sm:$0xff] %vm254, 0.0
      %283 = vst [vmem:[#allocation3 + $0xf0] sm:$0xff] 0.0
      %284 = vst [vmem:[#allocation3 + $0xf8] sm:$0xff] 0.0
      %285 = vst.msk [vmem:[#allocation3 + $0x100] sm:$0xff] %vm254, 0.0
      %286 = vst [vmem:[#allocation3 + $0x108] sm:$0xff] 0.0
      %287 = vst [vmem:[#allocation3 + $0x110] sm:$0xff] 0.0
      %288 = vst.msk [vmem:[#allocation3 + $0x118] sm:$0xff] %vm254, 0.0
      %289 = vst [vmem:[#allocation3 + $0x120] sm:$0xff] 0.0
      %290 = vst [vmem:[#allocation3 + $0x128] sm:$0xff] 0.0
      %291 = vst.msk [vmem:[#allocation3 + $0x130] sm:$0xff] %vm254, 0.0
      %292 = vst [vmem:[#allocation3 + $0x138] sm:$0xff] 0.0
      %293 = vst [vmem:[#allocation3 + $0x140] sm:$0xff] 0.0
      %294 = vst.msk [vmem:[#allocation3 + $0x148] sm:$0xff] %vm254, 0.0
      %295 = vst [vmem:[#allocation3 + $0x150] sm:$0xff] 0.0
      %296 = vst [vmem:[#allocation3 + $0x158] sm:$0xff] 0.0
      %297 = vst.msk [vmem:[#allocation3 + $0x160] sm:$0xff] %vm254, 0.0
      %298 = vst [vmem:[#allocation3 + $0x168] sm:$0xff] 0.0
      %299 = vst [vmem:[#allocation3 + $0x170] sm:$0xff] 0.0
      %300 = vst.msk [vmem:[#allocation3 + $0x178] sm:$0xff] %vm254, 0.0
      %301 = vst [vmem:[#allocation3 + $0x180] sm:$0xff] 0.0
      %302 = vst [vmem:[#allocation3 + $0x188] sm:$0xff] 0.0
      %303 = vst.msk [vmem:[#allocation3 + $0x190] sm:$0xff] %vm254, 0.0
      %304 = vst [vmem:[#allocation3 + $0x198] sm:$0xff] 0.0
      %305 = vst [vmem:[#allocation3 + $0x1a0] sm:$0xff] 0.0
      %306 = vst.msk [vmem:[#allocation3 + $0x1a8] sm:$0xff] %vm254, 0.0
      %307 = vst [vmem:[#allocation3 + $0x1b0] sm:$0xff] 0.0
      %308 = vst [vmem:[#allocation3 + $0x1b8] sm:$0xff] 0.0
      %309 = vst.msk [vmem:[#allocation3 + $0x1c0] sm:$0xff] %vm254, 0.0
      %310 = vst [vmem:[#allocation3 + $0x1c8] sm:$0xff] 0.0
      %311 = vst [vmem:[#allocation3 + $0x1d0] sm:$0xff] 0.0
      %312 = vst.msk [vmem:[#allocation3 + $0x1d8] sm:$0xff] %vm254, 0.0
      %313 = vst [vmem:[#allocation3 + $0x1e0] sm:$0xff] 0.0
      %314 = vst [vmem:[#allocation3 + $0x1e8] sm:$0xff] 0.0
      %315 = vst.msk [vmem:[#allocation3 + $0x1f0] sm:$0xff] %vm254, 0.0
      %316 = vst [vmem:[#allocation3 + $0x1f8] sm:$0xff] 0.0
      %317 = vst [vmem:[#allocation3 + $0x200] sm:$0xff] 0.0
      %318 = vst.msk [vmem:[#allocation3 + $0x208] sm:$0xff] %vm254, 0.0
      %319 = vst [vmem:[#allocation3 + $0x210] sm:$0xff] 0.0
      %320 = vst [vmem:[#allocation3 + $0x218] sm:$0xff] 0.0
      %321 = vst.msk [vmem:[#allocation3 + $0x220] sm:$0xff] %vm254, 0.0
      %322 = vst [vmem:[#allocation3 + $0x228] sm:$0xff] 0.0
      %323 = vst [vmem:[#allocation3 + $0x230] sm:$0xff] 0.0
      %324 = vst.msk [vmem:[#allocation3 + $0x238] sm:$0xff] %vm254, 0.0
      %325 = vst [vmem:[#allocation3 + $0x240] sm:$0xff] 0.0
      %326 = vst [vmem:[#allocation3 + $0x248] sm:$0xff] 0.0
      %327 = vst.msk [vmem:[#allocation3 + $0x250] sm:$0xff] %vm254, 0.0
      %328 = vst [vmem:[#allocation3 + $0x258] sm:$0xff] 0.0
      %329 = vst [vmem:[#allocation3 + $0x260] sm:$0xff] 0.0
      %330 = vst.msk [vmem:[#allocation3 + $0x268] sm:$0xff] %vm254, 0.0
      %331 = vst [vmem:[#allocation3 + $0x270] sm:$0xff] 0.0
      %332 = vst [vmem:[#allocation3 + $0x278] sm:$0xff] 0.0
      %333 = vst.msk [vmem:[#allocation3 + $0x280] sm:$0xff] %vm254, 0.0
      %334 = vst [vmem:[#allocation3 + $0x288] sm:$0xff] 0.0
      %335 = vst [vmem:[#allocation3 + $0x290] sm:$0xff] 0.0
      %336 = vst.msk [vmem:[#allocation3 + $0x298] sm:$0xff] %vm254, 0.0
      %337 = vst [vmem:[#allocation3 + $0x2a0] sm:$0xff] 0.0
      %338 = vst [vmem:[#allocation3 + $0x2a8] sm:$0xff] 0.0
      %339 = vst.msk [vmem:[#allocation3 + $0x2b0] sm:$0xff] %vm254, 0.0
      %340 = vst [vmem:[#allocation3 + $0x2b8] sm:$0xff] 0.0
      %341 = vst [vmem:[#allocation3 + $0x2c0] sm:$0xff] 0.0
      %342 = vst.msk [vmem:[#allocation3 + $0x2c8] sm:$0xff] %vm254, 0.0
      %343 = vst [vmem:[#allocation3 + $0x2d0] sm:$0xff] 0.0
      %344 = vst [vmem:[#allocation3 + $0x2d8] sm:$0xff] 0.0
      %345 = vst.msk [vmem:[#allocation3 + $0x2e0] sm:$0xff] %vm254, 0.0
      %346 = vst [vmem:[#allocation3 + $0x2e8] sm:$0xff] 0.0
      %347 = vst [vmem:[#allocation3 + $0x2f0] sm:$0xff] 0.0
      %348 = vst.msk [vmem:[#allocation3 + $0x2f8] sm:$0xff] %vm254, 0.0
      %v349 = vld [vmem:[%s232] sm:$0xf]
      %351 = vrot.lane.b32.xlu0 %v349, 42
      %v352 = vpop.permute.xlu0 %351
      %vm354 = vcmask 470352
      %355 = vst.msk [vmem:[#allocation2] sm:$0xf] %vm354, %v352
      %v356 = vld [vmem:[%s232] sm:$0xf]
      %358 = vrot.lane.b32.xlu0 %v356, 46
      %v359 = vpop.permute.xlu0 %358
      %vm361 = vcmask 634352
      %362 = vst.msk [vmem:[#allocation2] sm:$0xf] %vm361, %v359
      %v363 = vld [vmem:[%s232] sm:$0xf]
      %365 = vrot.lane.b32.xlu0 %v363, 50
      %v366 = vpop.permute.xlu0 %365
      %vm368 = vcmask 798352
      %369 = vst.msk [vmem:[#allocation2] sm:$0xf] %vm368, %v366
      %v370 = vld [vmem:[%s232] sm:$0xf]
      %372 = vrot.lane.b32.xlu0 %v370, 54
      %v373 = vpop.permute.xlu0 %372
      %vm375 = vcmask 962352
      %376 = vst.msk [vmem:[#allocation2] sm:$0xf] %vm375, %v373
      %v377 = vld [vmem:[%s232] sm:$0xf]
      %379 = vrot.lane.b32.xlu0 %v377, 58
      %v380 = vpop.permute.xlu0 %379
      %v381 = vrot.slane %v380, 4
      %vm382 = vcmask 474112
      %v383 = vsel %vm382, %v381, %v380
      %vm385 = vcmask 1044432
      %vm386 = vcmask 80900
      %vm387 = vmor %vm386, %vm385
      %388 = vst.msk [vmem:[#allocation2] sm:$0xff] %vm387, %v383
      %v389 = vld [vmem:[%s232] sm:$0xf]
      %391 = vrot.lane.b32.xlu0 %v389, 62
      %v392 = vpop.permute.xlu0 %391
      %vm394 = vcmask 240752
      %395 = vst.msk [vmem:[#allocation2 + $0x4] sm:$0xf] %vm394, %v392
      %v396 = vld [vmem:[%s232] sm:$0xf]
      %398 = vrot.lane.b32.xlu0 %v396, 66
      %v399 = vpop.permute.xlu0 %398
      %vm401 = vcmask 404752
      %402 = vst.msk [vmem:[#allocation2 + $0x4] sm:$0xf] %vm401, %v399
      %v403 = vld [vmem:[%s232] sm:$0xf]
      %405 = vrot.lane.b32.xlu0 %v403, 70
      %v406 = vpop.permute.xlu0 %405
      %vm408 = vcmask 568752
      %409 = vst.msk [vmem:[#allocation2 + $0x4] sm:$0xf] %vm408, %v406
      %v410 = vld [vmem:[%s232 + $0x4] sm:$0xf]
      %412 = vrot.lane.b32.xlu0 %v410, 74
      %v413 = vpop.permute.xlu0 %412
      %vm415 = vcmask 732752
      %416 = vst.msk [vmem:[#allocation2 + $0x4] sm:$0xf] %vm415, %v413
      %v417 = vld [vmem:[%s232 + $0x4] sm:$0xf]
      %419 = vrot.lane.b32.xlu0 %v417, 78
      %v420 = vpop.permute.xlu0 %419
      %vm422 = vcmask 896752
      %423 = vst.msk [vmem:[#allocation2 + $0x4] sm:$0xf] %vm422, %v420
      %v424 = vld [vmem:[%s232 + $0x4] sm:$0xf]
      %426 = vrot.lane.b32.xlu0 %v424, 82
      %v427 = vpop.permute.xlu0 %426
      %v428 = vrot.slane %v427, 4
      %vm429 = vcmask 670720
      %v430 = vsel %vm429, %v428, %v427
      %vm432 = vcmask 1044368
      %vm433 = vcmask 15364
      %vm434 = vmor %vm433, %vm432
      %435 = vst.msk [vmem:[#allocation2 + $0x4] sm:$0xff] %vm434, %v430
      %v436 = vld [vmem:[%s232 + $0x4] sm:$0xf]
      %438 = vrot.lane.b32.xlu0 %v436, 86
      %v439 = vpop.permute.xlu0 %438
      %vm441 = vcmask 175152
      %442 = vst.msk [vmem:[#allocation2 + $0x8] sm:$0xf] %vm441, %v439
      %v443 = vld [vmem:[%s232 + $0x4] sm:$0xf]
      %445 = vrot.lane.b32.xlu0 %v443, 90
      %v446 = vpop.permute.xlu0 %445
      %vm448 = vcmask 339152
      %449 = vst.msk [vmem:[#allocation2 + $0x8] sm:$0xf] %vm448, %v446
      %v450 = vld [vmem:[%s232 + $0x4] sm:$0xf]
      %452 = vrot.lane.b32.xlu0 %v450, 94
      %v453 = vpop.permute.xlu0 %452
      %vm455 = vcmask 503152
      %456 = vst.msk [vmem:[#allocation2 + $0x8] sm:$0xf] %vm455, %v453
      %v457 = vld [vmem:[%s232 + $0x4] sm:$0xf]
      %459 = vrot.lane.b32.xlu0 %v457, 98
      %v460 = vpop.permute.xlu0 %459
      %vm462 = vcmask 667152
      %463 = vst.msk [vmem:[#allocation2 + $0x8] sm:$0xf] %vm462, %v460
      %v464 = vld [vmem:[%s232 + $0x4] sm:$0xf]
      %466 = vrot.lane.b32.xlu0 %v464, 102
      %v467 = vpop.permute.xlu0 %466
      %vm469 = vcmask 831152
      %470 = vst.msk [vmem:[#allocation2 + $0x8] sm:$0xf] %vm469, %v467
      %v471 = vld [vmem:[#allocation2] sm:$0xff]
      %v472 = vld [vmem:[#allocation2 + $0x8] sm:$0xf]
      %v474 = vcombine.high %v471, %v471
      %476 = vst [vmem:[#allocation3] sm:$0xf] %v471
      %477 = vst [vmem:[#allocation3 + $0x8] sm:$0xf] %v474
      %vm478 = vcmask 519168
      %479 = vst.msk [vmem:[#allocation3 + $0x10] sm:$0xf] %vm478, %v472
      %v480 = vld [vmem:[#allocation2] sm:$0xff]
      %v481 = vld [vmem:[#allocation2 + $0x8] sm:$0xf]
      %v484 = vcombine.high %v480, %v480
      %485 = vrot.lane.b32.xlu0 %v480, 127
      %v486 = vpop.permute.xlu0 %485
      %487 = vrot.lane.b32.xlu0 %v484, 127
      %v488 = vpop.permute.xlu0 %487
      %489 = vrot.lane.b32.xlu0 %v481, 127
      %v490 = vpop.permute.xlu0 %489
      %vm491 = vcmask 1039360
      %v492 = vsel %vm491, %v486, %v488
      %v493 = vsel %vm491, %v488, %v490
      %497 = vst [vmem:[#allocation3 + $0x18] sm:$0xf] %v492
      %498 = vst [vmem:[#allocation3 + $0x20] sm:$0xf] %v493
      %499 = vst.msk [vmem:[#allocation3 + $0x28] sm:$0xf] %vm478, %v490
      %v500 = vld [vmem:[#allocation2] sm:$0xff]
      %v501 = vld [vmem:[#allocation2 + $0x8] sm:$0xf]
      %v504 = vcombine.high %v500, %v500
      %505 = vrot.lane.b32.xlu0 %v500, 126
      %v506 = vpop.permute.xlu0 %505
      %507 = vrot.lane.b32.xlu0 %v504, 126
      %v508 = vpop.permute.xlu0 %507
      %509 = vrot.lane.b32.xlu0 %v501, 126
      %v510 = vpop.permute.xlu0 %509
      %vm511 = vcmask 1031168
      %v512 = vsel %vm511, %v506, %v508
      %v513 = vsel %vm511, %v508, %v510
      %517 = vst [vmem:[#allocation3 + $0x30] sm:$0xf] %v512
      %518 = vst [vmem:[#allocation3 + $0x38] sm:$0xf] %v513
      %519 = vst.msk [vmem:[#allocation3 + $0x40] sm:$0xf] %vm478, %v510
      %v520 = vld [vmem:[#allocation2] sm:$0xff]
      %v521 = vld [vmem:[#allocation2 + $0x8] sm:$0xf]
      %v524 = vcombine.high %v520, %v520
      %525 = vrot.lane.b32.xlu0 %v520, 125
      %v526 = vpop.permute.xlu0 %525
      %527 = vrot.lane.b32.xlu0 %v524, 125
      %v528 = vpop.permute.xlu0 %527
      %529 = vrot.lane.b32.xlu0 %v521, 125
      %v530 = vpop.permute.xlu0 %529
      %vm531 = vcmask 1022976
      %v532 = vsel %vm531, %v526, %v528
      %v533 = vsel %vm531, %v528, %v530
      %537 = vst [vmem:[#allocation3 + $0x48] sm:$0xf] %v532
      %538 = vst [vmem:[#allocation3 + $0x50] sm:$0xf] %v533
      %539 = vst.msk [vmem:[#allocation3 + $0x58] sm:$0xf] %vm478, %v530
      %v540 = vld [vmem:[#allocation2] sm:$0xff]
      %v541 = vld [vmem:[#allocation2 + $0x8] sm:$0xf]
      %v544 = vcombine.high %v540, %v540
      %545 = vrot.lane.b32.xlu0 %v540, 124
      %v546 = vpop.permute.xlu0 %545
      %547 = vrot.lane.b32.xlu0 %v544, 124
      %v548 = vpop.permute.xlu0 %547
      %549 = vrot.lane.b32.xlu0 %v541, 124
      %v550 = vpop.permute.xlu0 %549
      %vm551 = vcmask 1014784
      %v552 = vsel %vm551, %v546, %v548
      %v553 = vsel %vm551, %v548, %v550
      %557 = vst [vmem:[#allocation3 + $0x60] sm:$0xf] %v552
      %558 = vst [vmem:[#allocation3 + $0x68] sm:$0xf] %v553
      %559 = vst.msk [vmem:[#allocation3 + $0x70] sm:$0xf] %vm478, %v550
      %v560 = vld [vmem:[#allocation2] sm:$0xff]
      %v561 = vld [vmem:[#allocation2 + $0x8] sm:$0xf]
      %v564 = vcombine.high %v560, %v560
      %565 = vrot.lane.b32.xlu0 %v560, 108
      %v566 = vpop.permute.xlu0 %565
      %567 = vrot.lane.b32.xlu0 %v564, 108
      %v568 = vpop.permute.xlu0 %567
      %569 = vrot.lane.b32.xlu0 %v561, 108
      %v570 = vpop.permute.xlu0 %569
      %vm571 = vcmask 883712
      %v572 = vsel %vm571, %v566, %v568
      %v573 = vsel %vm571, %v568, %v570
      %577 = vst [vmem:[#allocation3 + $0x78] sm:$0xf] %v572
      %578 = vst [vmem:[#allocation3 + $0x80] sm:$0xf] %v573
      %579 = vst.msk [vmem:[#allocation3 + $0x88] sm:$0xf] %vm478, %v570
      %v580 = vld [vmem:[#allocation2] sm:$0xff]
      %v581 = vld [vmem:[#allocation2 + $0x8] sm:$0xf]
      %v584 = vcombine.high %v580, %v580
      %585 = vrot.lane.b32.xlu0 %v580, 107
      %v586 = vpop.permute.xlu0 %585
      %587 = vrot.lane.b32.xlu0 %v584, 107
      %v588 = vpop.permute.xlu0 %587
      %589 = vrot.lane.b32.xlu0 %v581, 107
      %v590 = vpop.permute.xlu0 %589
      %vm591 = vcmask 875520
      %v592 = vsel %vm591, %v586, %v588
      %v593 = vsel %vm591, %v588, %v590
      %597 = vst [vmem:[#allocation3 + $0x90] sm:$0xf] %v592
      %598 = vst [vmem:[#allocation3 + $0x98] sm:$0xf] %v593
      %599 = vst.msk [vmem:[#allocation3 + $0xa0] sm:$0xf] %vm478, %v590
      %v600 = vld [vmem:[#allocation2] sm:$0xff]
      %v601 = vld [vmem:[#allocation2 + $0x8] sm:$0xf]
      %v604 = vcombine.high %v600, %v600
      %605 = vrot.lane.b32.xlu0 %v600, 106
      %v606 = vpop.permute.xlu0 %605
      %607 = vrot.lane.b32.xlu0 %v604, 106
      %v608 = vpop.permute.xlu0 %607
      %609 = vrot.lane.b32.xlu0 %v601, 106
      %v610 = vpop.permute.xlu0 %609
      %vm611 = vcmask 867328
      %v612 = vsel %vm611, %v606, %v608
      %v613 = vsel %vm611, %v608, %v610
      %617 = vst [vmem:[#allocation3 + $0xa8] sm:$0xf] %v612
      %618 = vst [vmem:[#allocation3 + $0xb0] sm:$0xf] %v613
      %619 = vst.msk [vmem:[#allocation3 + $0xb8] sm:$0xf] %vm478, %v610
      %v620 = vld [vmem:[#allocation2] sm:$0xff]
      %v621 = vld [vmem:[#allocation2 + $0x8] sm:$0xf]
      %v624 = vcombine.high %v620, %v620
      %625 = vrot.lane.b32.xlu0 %v620, 105
      %v626 = vpop.permute.xlu0 %625
      %627 = vrot.lane.b32.xlu0 %v624, 105
      %v628 = vpop.permute.xlu0 %627
      %629 = vrot.lane.b32.xlu0 %v621, 105
      %v630 = vpop.permute.xlu0 %629
      %vm631 = vcmask 859136
      %v632 = vsel %vm631, %v626, %v628
      %v633 = vsel %vm631, %v628, %v630
      %637 = vst [vmem:[#allocation3 + $0xc0] sm:$0xf] %v632
      %638 = vst [vmem:[#allocation3 + $0xc8] sm:$0xf] %v633
      %639 = vst.msk [vmem:[#allocation3 + $0xd0] sm:$0xf] %vm478, %v630
      %v640 = vld [vmem:[#allocation2] sm:$0xff]
      %v641 = vld [vmem:[#allocation2 + $0x8] sm:$0xf]
      %v644 = vcombine.high %v640, %v640
      %645 = vrot.lane.b32.xlu0 %v640, 104
      %v646 = vpop.permute.xlu0 %645
      %647 = vrot.lane.b32.xlu0 %v644, 104
      %v648 = vpop.permute.xlu0 %647
      %649 = vrot.lane.b32.xlu0 %v641, 104
      %v650 = vpop.permute.xlu0 %649
      %vm651 = vcmask 850944
      %v652 = vsel %vm651, %v646, %v648
      %v653 = vsel %vm651, %v648, %v650
      %657 = vst [vmem:[#allocation3 + $0xd8] sm:$0xf] %v652
      %658 = vst [vmem:[#allocation3 + $0xe0] sm:$0xf] %v653
      %659 = vst.msk [vmem:[#allocation3 + $0xe8] sm:$0xf] %vm478, %v650
      %v660 = vld [vmem:[#allocation2] sm:$0xff]
      %v661 = vld [vmem:[#allocation2 + $0x8] sm:$0xf]
      %v664 = vcombine.high %v660, %v660
      %665 = vrot.lane.b32.xlu0 %v660, 88
      %v666 = vpop.permute.xlu0 %665
      %667 = vrot.lane.b32.xlu0 %v664, 88
      %v668 = vpop.permute.xlu0 %667
      %669 = vrot.lane.b32.xlu0 %v661, 88
      %v670 = vpop.permute.xlu0 %669
      %vm671 = vcmask 719872
      %v672 = vsel %vm671, %v666, %v668
      %v673 = vsel %vm671, %v668, %v670
      %677 = vst [vmem:[#allocation3 + $0xf0] sm:$0xf] %v672
      %678 = vst [vmem:[#allocation3 + $0xf8] sm:$0xf] %v673
      %679 = vst.msk [vmem:[#allocation3 + $0x100] sm:$0xf] %vm478, %v670
      %v680 = vld [vmem:[#allocation2] sm:$0xff]
      %v681 = vld [vmem:[#allocation2 + $0x8] sm:$0xf]
      %v684 = vcombine.high %v680, %v680
      %685 = vrot.lane.b32.xlu0 %v680, 87
      %v686 = vpop.permute.xlu0 %685
      %687 = vrot.lane.b32.xlu0 %v684, 87
      %v688 = vpop.permute.xlu0 %687
      %689 = vrot.lane.b32.xlu0 %v681, 87
      %v690 = vpop.permute.xlu0 %689
      %vm691 = vcmask 711680
      %v692 = vsel %vm691, %v686, %v688
      %v693 = vsel %vm691, %v688, %v690
      %697 = vst [vmem:[#allocation3 + $0x108] sm:$0xf] %v692
      %698 = vst [vmem:[#allocation3 + $0x110] sm:$0xf] %v693
      %699 = vst.msk [vmem:[#allocation3 + $0x118] sm:$0xf] %vm478, %v690
      %v700 = vld [vmem:[#allocation2] sm:$0xff]
      %v701 = vld [vmem:[#allocation2 + $0x8] sm:$0xf]
      %v704 = vcombine.high %v700, %v700
      %705 = vrot.lane.b32.xlu0 %v700, 86
      %v706 = vpop.permute.xlu0 %705
      %707 = vrot.lane.b32.xlu0 %v704, 86
      %v708 = vpop.permute.xlu0 %707
      %709 = vrot.lane.b32.xlu0 %v701, 86
      %v710 = vpop.permute.xlu0 %709
      %vm711 = vcmask 703488
      %v712 = vsel %vm711, %v706, %v708
      %v713 = vsel %vm711, %v708, %v710
      %717 = vst [vmem:[#allocation3 + $0x120] sm:$0xf] %v712
      %718 = vst [vmem:[#allocation3 + $0x128] sm:$0xf] %v713
      %719 = vst.msk [vmem:[#allocation3 + $0x130] sm:$0xf] %vm478, %v710
      %v720 = vld [vmem:[#allocation2] sm:$0xff]
      %v721 = vld [vmem:[#allocation2 + $0x8] sm:$0xf]
      %v724 = vcombine.high %v720, %v720
      %725 = vrot.lane.b32.xlu0 %v720, 85
      %v726 = vpop.permute.xlu0 %725
      %727 = vrot.lane.b32.xlu0 %v724, 85
      %v728 = vpop.permute.xlu0 %727
      %729 = vrot.lane.b32.xlu0 %v721, 85
      %v730 = vpop.permute.xlu0 %729
      %vm731 = vcmask 695296
      %v732 = vsel %vm731, %v726, %v728
      %v733 = vsel %vm731, %v728, %v730
      %737 = vst [vmem:[#allocation3 + $0x138] sm:$0xf] %v732
      %738 = vst [vmem:[#allocation3 + $0x140] sm:$0xf] %v733
      %739 = vst.msk [vmem:[#allocation3 + $0x148] sm:$0xf] %vm478, %v730
      %v740 = vld [vmem:[#allocation2] sm:$0xff]
      %v741 = vld [vmem:[#allocation2 + $0x8] sm:$0xf]
      %v744 = vcombine.high %v740, %v740
      %745 = vrot.lane.b32.xlu0 %v740, 84
      %v746 = vpop.permute.xlu0 %745
      %747 = vrot.lane.b32.xlu0 %v744, 84
      %v748 = vpop.permute.xlu0 %747
      %749 = vrot.lane.b32.xlu0 %v741, 84
      %v750 = vpop.permute.xlu0 %749
      %vm751 = vcmask 687104
      %v752 = vsel %vm751, %v746, %v748
      %v753 = vsel %vm751, %v748, %v750
      %757 = vst [vmem:[#allocation3 + $0x150] sm:$0xf] %v752
      %758 = vst [vmem:[#allocation3 + $0x158] sm:$0xf] %v753
      %759 = vst.msk [vmem:[#allocation3 + $0x160] sm:$0xf] %vm478, %v750
      %v760 = vld [vmem:[#allocation2] sm:$0xff]
      %v761 = vld [vmem:[#allocation2 + $0x8] sm:$0xf]
      %v764 = vcombine.high %v760, %v760
      %765 = vrot.lane.b32.xlu0 %v760, 68
      %v766 = vpop.permute.xlu0 %765
      %767 = vrot.lane.b32.xlu0 %v764, 68
      %v768 = vpop.permute.xlu0 %767
      %769 = vrot.lane.b32.xlu0 %v761, 68
      %v770 = vpop.permute.xlu0 %769
      %vm771 = vcmask 556032
      %v772 = vsel %vm771, %v766, %v768
      %v773 = vsel %vm771, %v768, %v770
      %777 = vst [vmem:[#allocation3 + $0x168] sm:$0xf] %v772
      %778 = vst [vmem:[#allocation3 + $0x170] sm:$0xf] %v773
      %779 = vst.msk [vmem:[#allocation3 + $0x178] sm:$0xf] %vm478, %v770
      %v780 = vld [vmem:[#allocation2] sm:$0xff]
      %v781 = vld [vmem:[#allocation2 + $0x8] sm:$0xf]
      %v784 = vcombine.high %v780, %v780
      %785 = vrot.lane.b32.xlu0 %v780, 67
      %v786 = vpop.permute.xlu0 %785
      %787 = vrot.lane.b32.xlu0 %v784, 67
      %v788 = vpop.permute.xlu0 %787
      %789 = vrot.lane.b32.xlu0 %v781, 67
      %v790 = vpop.permute.xlu0 %789
      %vm791 = vcmask 547840
      %v792 = vsel %vm791, %v786, %v788
      %v793 = vsel %vm791, %v788, %v790
      %797 = vst [vmem:[#allocation3 + $0x180] sm:$0xf] %v792
      %798 = vst [vmem:[#allocation3 + $0x188] sm:$0xf] %v793
      %799 = vst.msk [vmem:[#allocation3 + $0x190] sm:$0xf] %vm478, %v790
      %v800 = vld [vmem:[#allocation2] sm:$0xff]
      %v801 = vld [vmem:[#allocation2 + $0x8] sm:$0xf]
      %v804 = vcombine.high %v800, %v800
      %805 = vrot.lane.b32.xlu0 %v800, 66
      %v806 = vpop.permute.xlu0 %805
      %807 = vrot.lane.b32.xlu0 %v804, 66
      %v808 = vpop.permute.xlu0 %807
      %809 = vrot.lane.b32.xlu0 %v801, 66
      %v810 = vpop.permute.xlu0 %809
      %vm811 = vcmask 539648
      %v812 = vsel %vm811, %v806, %v808
      %v813 = vsel %vm811, %v808, %v810
      %817 = vst [vmem:[#allocation3 + $0x198] sm:$0xf] %v812
      %818 = vst [vmem:[#allocation3 + $0x1a0] sm:$0xf] %v813
      %819 = vst.msk [vmem:[#allocation3 + $0x1a8] sm:$0xf] %vm478, %v810
      %v820 = vld [vmem:[#allocation2] sm:$0xff]
      %v821 = vld [vmem:[#allocation2 + $0x8] sm:$0xf]
      %v824 = vcombine.high %v820, %v820
      %825 = vrot.lane.b32.xlu0 %v820, 65
      %v826 = vpop.permute.xlu0 %825
      %827 = vrot.lane.b32.xlu0 %v824, 65
      %v828 = vpop.permute.xlu0 %827
      %829 = vrot.lane.b32.xlu0 %v821, 65
      %v830 = vpop.permute.xlu0 %829
      %vm831 = vcmask 531456
      %v832 = vsel %vm831, %v826, %v828
      %v833 = vsel %vm831, %v828, %v830
      %837 = vst [vmem:[#allocation3 + $0x1b0] sm:$0xf] %v832
      %838 = vst [vmem:[#allocation3 + $0x1b8] sm:$0xf] %v833
      %839 = vst.msk [vmem:[#allocation3 + $0x1c0] sm:$0xf] %vm478, %v830
      %v840 = vld [vmem:[#allocation2] sm:$0xff]
      %v841 = vld [vmem:[#allocation2 + $0x8] sm:$0xf]
      %v844 = vcombine.high %v840, %v840
      %845 = vrot.lane.b32.xlu0 %v840, 64
      %v846 = vpop.permute.xlu0 %845
      %847 = vrot.lane.b32.xlu0 %v844, 64
      %v848 = vpop.permute.xlu0 %847
      %849 = vrot.lane.b32.xlu0 %v841, 64
      %v850 = vpop.permute.xlu0 %849
      %v851 = vsel %vm254, %v846, %v848
      %v852 = vsel %vm254, %v848, %v850
      %856 = vst [vmem:[#allocation3 + $0x1c8] sm:$0xf] %v851
      %857 = vst [vmem:[#allocation3 + $0x1d0] sm:$0xf] %v852
      %858 = vst.msk [vmem:[#allocation3 + $0x1d8] sm:$0xf] %vm478, %v850
      %v859 = vld [vmem:[#allocation2] sm:$0xff]
      %v860 = vld [vmem:[#allocation2 + $0x8] sm:$0xff]
      %v863 = vcombine.high %v859, %v859
      %v864 = vcombine.high %v860, %v860
      %865 = vrot.lane.b32.xlu0 %v859, 48
      %v866 = vpop.permute.xlu0 %865
      %867 = vrot.lane.b32.xlu0 %v863, 48
      %v868 = vpop.permute.xlu0 %867
      %869 = vrot.lane.b32.xlu0 %v860, 48
      %v870 = vpop.permute.xlu0 %869
      %871 = vrot.lane.b32.xlu0 %v864, 48
      %v872 = vpop.permute.xlu0 %871
      %vm873 = vcmask 392192
      %v874 = vsel %vm873, %v866, %v868
      %v875 = vsel %vm873, %v868, %v870
      %v876 = vsel %vm873, %v870, %v872
      %880 = vst [vmem:[#allocation3 + $0x1e0] sm:$0xf] %v874
      %881 = vst [vmem:[#allocation3 + $0x1e8] sm:$0xf] %v875
      %882 = vst.msk [vmem:[#allocation3 + $0x1f0] sm:$0xf] %vm478, %v876
      %v883 = vld [vmem:[#allocation2] sm:$0xff]
      %v884 = vld [vmem:[#allocation2 + $0x8] sm:$0xff]
      %v887 = vcombine.high %v883, %v883
      %v888 = vcombine.high %v884, %v884
      %889 = vrot.lane.b32.xlu0 %v883, 47
      %v890 = vpop.permute.xlu0 %889
      %891 = vrot.lane.b32.xlu0 %v887, 47
      %v892 = vpop.permute.xlu0 %891
      %893 = vrot.lane.b32.xlu0 %v884, 47
      %v894 = vpop.permute.xlu0 %893
      %895 = vrot.lane.b32.xlu0 %v888, 47
      %v896 = vpop.permute.xlu0 %895
      %vm897 = vcmask 384000
      %v898 = vsel %vm897, %v890, %v892
      %v899 = vsel %vm897, %v892, %v894
      %v900 = vsel %vm897, %v894, %v896
      %904 = vst [vmem:[#allocation3 + $0x1f8] sm:$0xf] %v898
      %905 = vst [vmem:[#allocation3 + $0x200] sm:$0xf] %v899
      %906 = vst.msk [vmem:[#allocation3 + $0x208] sm:$0xf] %vm478, %v900
      %v907 = vld [vmem:[#allocation2] sm:$0xff]
      %v908 = vld [vmem:[#allocation2 + $0x8] sm:$0xff]
      %v911 = vcombine.high %v907, %v907
      %v912 = vcombine.high %v908, %v908
      %913 = vrot.lane.b32.xlu0 %v907, 46
      %v914 = vpop.permute.xlu0 %913
      %915 = vrot.lane.b32.xlu0 %v911, 46
      %v916 = vpop.permute.xlu0 %915
      %917 = vrot.lane.b32.xlu0 %v908, 46
      %v918 = vpop.permute.xlu0 %917
      %919 = vrot.lane.b32.xlu0 %v912, 46
      %v920 = vpop.permute.xlu0 %919
      %vm921 = vcmask 375808
      %v922 = vsel %vm921, %v914, %v916
      %v923 = vsel %vm921, %v916, %v918
      %v924 = vsel %vm921, %v918, %v920
      %928 = vst [vmem:[#allocation3 + $0x210] sm:$0xf] %v922
      %929 = vst [vmem:[#allocation3 + $0x218] sm:$0xf] %v923
      %930 = vst.msk [vmem:[#allocation3 + $0x220] sm:$0xf] %vm478, %v924
      %v931 = vld [vmem:[#allocation2] sm:$0xff]
      %v932 = vld [vmem:[#allocation2 + $0x8] sm:$0xff]
      %v935 = vcombine.high %v931, %v931
      %v936 = vcombine.high %v932, %v932
      %937 = vrot.lane.b32.xlu0 %v931, 45
      %v938 = vpop.permute.xlu0 %937
      %939 = vrot.lane.b32.xlu0 %v935, 45
      %v940 = vpop.permute.xlu0 %939
      %941 = vrot.lane.b32.xlu0 %v932, 45
      %v942 = vpop.permute.xlu0 %941
      %943 = vrot.lane.b32.xlu0 %v936, 45
      %v944 = vpop.permute.xlu0 %943
      %vm945 = vcmask 367616
      %v946 = vsel %vm945, %v938, %v940
      %v947 = vsel %vm945, %v940, %v942
      %v948 = vsel %vm945, %v942, %v944
      %952 = vst [vmem:[#allocation3 + $0x228] sm:$0xf] %v946
      %953 = vst [vmem:[#allocation3 + $0x230] sm:$0xf] %v947
      %954 = vst.msk [vmem:[#allocation3 + $0x238] sm:$0xf] %vm478, %v948
      %v955 = vld [vmem:[#allocation2] sm:$0xff]
      %v956 = vld [vmem:[#allocation2 + $0x8] sm:$0xff]
      %v959 = vcombine.high %v955, %v955
      %v960 = vcombine.high %v956, %v956
      %961 = vrot.lane.b32.xlu0 %v955, 44
      %v962 = vpop.permute.xlu0 %961
      %963 = vrot.lane.b32.xlu0 %v959, 44
      %v964 = vpop.permute.xlu0 %963
      %965 = vrot.lane.b32.xlu0 %v956, 44
      %v966 = vpop.permute.xlu0 %965
      %967 = vrot.lane.b32.xlu0 %v960, 44
      %v968 = vpop.permute.xlu0 %967
      %vm969 = vcmask 359424
      %v970 = vsel %vm969, %v962, %v964
      %v971 = vsel %vm969, %v964, %v966
      %v972 = vsel %vm969, %v966, %v968
      %976 = vst [vmem:[#allocation3 + $0x240] sm:$0xf] %v970
      %977 = vst [vmem:[#allocation3 + $0x248] sm:$0xf] %v971
      %978 = vst.msk [vmem:[#allocation3 + $0x250] sm:$0xf] %vm478, %v972
      %v979 = vld [vmem:[%s1] sm:$0xff]
      %v980 = vld [vmem:[#allocation3] sm:$0xff]
      %v981 = vld [vmem:[#allocation3 + $0x8] sm:$0xff]
      %v982 = vld [vmem:[#allocation3 + $0x10] sm:$0xff]
      %v983 = vld [vmem:[#allocation3 + $0x18] sm:$0xff]
      %v984 = vld [vmem:[#allocation3 + $0x20] sm:$0xff]
      %v985 = vld [vmem:[#allocation3 + $0x28] sm:$0xff]
      %v986 = vld [vmem:[#allocation3 + $0x30] sm:$0xff]
      %v987 = vld [vmem:[#allocation3 + $0x38] sm:$0xff]
      %v988 = vld [vmem:[#allocation3 + $0x40] sm:$0xff]
      %v989 = vld [vmem:[#allocation3 + $0x48] sm:$0xff]
      %v990 = vld [vmem:[#allocation3 + $0x50] sm:$0xff]
      %v991 = vld [vmem:[#allocation3 + $0x58] sm:$0xff]
      %v992 = vld [vmem:[#allocation3 + $0x60] sm:$0xff]
      %v993 = vld [vmem:[#allocation3 + $0x68] sm:$0xff]
      %v994 = vld [vmem:[#allocation3 + $0x70] sm:$0xff]
      %v995 = vld [vmem:[#allocation3 + $0x78] sm:$0xff]
      %v996 = vld [vmem:[#allocation3 + $0x80] sm:$0xff]
      %v997 = vld [vmem:[#allocation3 + $0x88] sm:$0xff]
      %v998 = vld [vmem:[#allocation3 + $0x90] sm:$0xff]
      %v999 = vld [vmem:[#allocation3 + $0x98] sm:$0xff]
      %v1000 = vld [vmem:[#allocation3 + $0xa0] sm:$0xff]
      %v1001 = vld [vmem:[#allocation3 + $0xa8] sm:$0xff]
      %v1002 = vld [vmem:[#allocation3 + $0xb0] sm:$0xff]
      %v1003 = vld [vmem:[#allocation3 + $0xb8] sm:$0xff]
      %v1004 = vld [vmem:[#allocation3 + $0xc0] sm:$0xff]
      %v1005 = vld [vmem:[#allocation3 + $0xc8] sm:$0xff]
      %v1006 = vld [vmem:[#allocation3 + $0xd0] sm:$0xff]
      %v1007 = vld [vmem:[#allocation3 + $0xd8] sm:$0xff]
      %v1008 = vld [vmem:[#allocation3 + $0xe0] sm:$0xff]
      %v1009 = vld [vmem:[#allocation3 + $0xe8] sm:$0xff]
      %v1010 = vld [vmem:[#allocation3 + $0xf0] sm:$0xff]
      %v1011 = vld [vmem:[#allocation3 + $0xf8] sm:$0xff]
      %v1012 = vld [vmem:[#allocation3 + $0x100] sm:$0xff]
      %v1013 = vld [vmem:[#allocation3 + $0x108] sm:$0xff]
      %v1014 = vld [vmem:[#allocation3 + $0x110] sm:$0xff]
      %v1015 = vld [vmem:[#allocation3 + $0x118] sm:$0xff]
      %v1016 = vld [vmem:[#allocation3 + $0x120] sm:$0xff]
      %v1017 = vld [vmem:[#allocation3 + $0x128] sm:$0xff]
      %v1018 = vld [vmem:[#allocation3 + $0x130] sm:$0xff]
      %v1019 = vld [vmem:[#allocation3 + $0x138] sm:$0xff]
      %v1020 = vld [vmem:[#allocation3 + $0x140] sm:$0xff]
      %v1021 = vld [vmem:[#allocation3 + $0x148] sm:$0xff]
      %v1022 = vld [vmem:[#allocation3 + $0x150] sm:$0xff]
      %v1023 = vld [vmem:[#allocation3 + $0x158] sm:$0xff]
      %v1024 = vld [vmem:[#allocation3 + $0x160] sm:$0xff]
      %v1025 = vld [vmem:[#allocation3 + $0x168] sm:$0xff]
      %v1026 = vld [vmem:[#allocation3 + $0x170] sm:$0xff]
      %v1027 = vld [vmem:[#allocation3 + $0x178] sm:$0xff]
      %v1028 = vld [vmem:[#allocation3 + $0x180] sm:$0xff]
      %v1029 = vld [vmem:[#allocation3 + $0x188] sm:$0xff]
      %v1030 = vld [vmem:[#allocation3 + $0x190] sm:$0xff]
      %v1031 = vld [vmem:[#allocation3 + $0x198] sm:$0xff]
      %v1032 = vld [vmem:[#allocation3 + $0x1a0] sm:$0xff]
      %v1033 = vld [vmem:[#allocation3 + $0x1a8] sm:$0xff]
      %v1034 = vld [vmem:[#allocation3 + $0x1b0] sm:$0xff]
      %v1035 = vld [vmem:[#allocation3 + $0x1b8] sm:$0xff]
      %v1036 = vld [vmem:[#allocation3 + $0x1c0] sm:$0xff]
      %v1037 = vld [vmem:[#allocation3 + $0x1c8] sm:$0xff]
      %v1038 = vld [vmem:[#allocation3 + $0x1d0] sm:$0xff]
      %v1039 = vld [vmem:[#allocation3 + $0x1d8] sm:$0xff]
      %v1040 = vld [vmem:[#allocation3 + $0x1e0] sm:$0xff]
      %v1041 = vld [vmem:[#allocation3 + $0x1e8] sm:$0xff]
      %v1042 = vld [vmem:[#allocation3 + $0x1f0] sm:$0xff]
      %v1043 = vld [vmem:[#allocation3 + $0x1f8] sm:$0xff]
      %v1044 = vld [vmem:[#allocation3 + $0x200] sm:$0xff]
      %v1045 = vld [vmem:[#allocation3 + $0x208] sm:$0xff]
      %v1046 = vld [vmem:[#allocation3 + $0x210] sm:$0xff]
      %v1047 = vld [vmem:[#allocation3 + $0x218] sm:$0xff]
      %v1048 = vld [vmem:[#allocation3 + $0x220] sm:$0xff]
      %v1049 = vld [vmem:[#allocation3 + $0x228] sm:$0xff]
      %v1050 = vld [vmem:[#allocation3 + $0x230] sm:$0xff]
      %v1051 = vld [vmem:[#allocation3 + $0x238] sm:$0xff]
      %v1052 = vld [vmem:[#allocation3 + $0x240] sm:$0xff]
      %v1053 = vld [vmem:[#allocation3 + $0x248] sm:$0xff]
      %v1054 = vld [vmem:[#allocation3 + $0x250] sm:$0xff]
      %v1055 = vld [vmem:[#allocation3 + $0x258] sm:$0xff]
      %v1056 = vld [vmem:[#allocation3 + $0x260] sm:$0xff]
      %v1057 = vld [vmem:[#allocation3 + $0x268] sm:$0xff]
      %v1058 = vld [vmem:[#allocation3 + $0x270] sm:$0xff]
      %v1059 = vld [vmem:[#allocation3 + $0x278] sm:$0xff]
      %v1060 = vld [vmem:[#allocation3 + $0x280] sm:$0xff]
      %v1061 = vld [vmem:[#allocation3 + $0x288] sm:$0xff]
      %v1062 = vld [vmem:[#allocation3 + $0x290] sm:$0xff]
      %v1063 = vld [vmem:[#allocation3 + $0x298] sm:$0xff]
      %v1064 = vld [vmem:[#allocation3 + $0x2a0] sm:$0xff]
      %v1065 = vld [vmem:[#allocation3 + $0x2a8] sm:$0xff]
      %v1066 = vld [vmem:[#allocation3 + $0x2b0] sm:$0xff]
      %v1067 = vld [vmem:[#allocation3 + $0x2b8] sm:$0xff]
      %v1068 = vld [vmem:[#allocation3 + $0x2c0] sm:$0xff]
      %v1069 = vld [vmem:[#allocation3 + $0x2c8] sm:$0xff]
      %v1070 = vld [vmem:[#allocation3 + $0x2d0] sm:$0xff]
      %v1071 = vld [vmem:[#allocation3 + $0x2d8] sm:$0xff]
      %v1072 = vld [vmem:[#allocation3 + $0x2e0] sm:$0xff]
      %v1073 = vld [vmem:[#allocation3 + $0x2e8] sm:$0xff]
      %v1074 = vld [vmem:[#allocation3 + $0x2f0] sm:$0xff]
      %v1075 = vld [vmem:[#allocation3 + $0x2f8] sm:$0xff]
      %v1076 = vpack.c.bf16 %v983, %v980
      %v1077 = vpack.c.bf16 %v984, %v981
      %v1078 = vpack.c.bf16 %v985, %v982
      %v1079 = vpack.c.bf16 %v989, %v986
      %v1080 = vpack.c.bf16 %v990, %v987
      %v1081 = vpack.c.bf16 %v991, %v988
      %v1082 = vpack.c.bf16 %v995, %v992
      %v1083 = vpack.c.bf16 %v996, %v993
      %v1084 = vpack.c.bf16 %v997, %v994
      %v1085 = vpack.c.bf16 %v1001, %v998
      %v1086 = vpack.c.bf16 %v1002, %v999
      %v1087 = vpack.c.bf16 %v1003, %v1000
      %v1088 = vpack.c.bf16 %v1007, %v1004
      %v1089 = vpack.c.bf16 %v1008, %v1005
      %v1090 = vpack.c.bf16 %v1009, %v1006
      %v1091 = vpack.c.bf16 %v1013, %v1010
      %v1092 = vpack.c.bf16 %v1014, %v1011
      %v1093 = vpack.c.bf16 %v1015, %v1012
      %v1094 = vpack.c.bf16 %v1019, %v1016
      %v1095 = vpack.c.bf16 %v1020, %v1017
      %v1096 = vpack.c.bf16 %v1021, %v1018
      %v1097 = vpack.c.bf16 %v1025, %v1022
      %v1098 = vpack.c.bf16 %v1026, %v1023
      %v1099 = vpack.c.bf16 %v1027, %v1024
      %v1100 = vpack.c.bf16 %v1031, %v1028
      %v1101 = vpack.c.bf16 %v1032, %v1029
      %v1102 = vpack.c.bf16 %v1033, %v1030
      %v1103 = vpack.c.bf16 %v1037, %v1034
      %v1104 = vpack.c.bf16 %v1038, %v1035
      %v1105 = vpack.c.bf16 %v1039, %v1036
      %v1106 = vpack.c.bf16 %v1043, %v1040
      %v1107 = vpack.c.bf16 %v1044, %v1041
      %v1108 = vpack.c.bf16 %v1045, %v1042
      %v1109 = vpack.c.bf16 %v1049, %v1046
      %v1110 = vpack.c.bf16 %v1050, %v1047
      %v1111 = vpack.c.bf16 %v1051, %v1048
      %v1112 = vpack.c.bf16 %v1055, %v1052
      %v1113 = vpack.c.bf16 %v1056, %v1053
      %v1114 = vpack.c.bf16 %v1057, %v1054
      %v1115 = vpack.c.bf16 %v1061, %v1058
      %v1116 = vpack.c.bf16 %v1062, %v1059
      %v1117 = vpack.c.bf16 %v1063, %v1060
      %v1118 = vpack.c.bf16 %v1067, %v1064
      %v1119 = vpack.c.bf16 %v1068, %v1065
      %v1120 = vpack.c.bf16 %v1069, %v1066
      %v1121 = vpack.c.bf16 %v1073, %v1070
      %v1122 = vpack.c.bf16 %v1074, %v1071
      %v1123 = vpack.c.bf16 %v1075, %v1072
      %v1124 = vld [vmem:[%s2] sm:$0xff]
      %1126 = vset.pattern.permute.xlu0 0
      %1127 = vperm.xlu0 %1126, %v1124
      %v1128 = vpop.permute.xlu0 %1127
      %v1131 = vunpack.c.l.b16 %v979
      %v1132 = vunpack.c.h.b16 %v979
      %v1133 = vpack.c.b16 %v1131, %v1131
      %v1134 = vpack.c.b16 %v1132, %v1132
      %1137 = vmatprep.subr.bf16.mxu0 %v1077
      %1138 = vmatpush1.bf16.msra.mxu0 %v1076
      %1139 = vmatprep.subr.bf16.mxu0 %v1080
      %1140 = vmatpush1.bf16.msra.mxu0 %v1079
      %1141 = vmatprep.subr.bf16.mxu0 %v1083
      %1142 = vmatpush1.bf16.msra.mxu0 %v1082
      %1143 = vmatprep.subr.bf16.mxu0 %v1086
      %1144 = vmatpush1.bf16.msra.mxu0 %v1085
      %1145 = vmatprep.subr.bf16.mxu0 %v1089
      %1146 = vmatpush1.bf16.msra.mxu0 %v1088
      %1147 = vmatprep.subr.bf16.mxu0 %v1092
      %1148 = vmatpush1.bf16.msra.mxu0 %v1091
      %1149 = vmatprep.subr.bf16.mxu0 %v1095
      %1150 = vmatpush1.bf16.msra.mxu0 %v1094
      %1151 = vmatprep.subr.bf16.mxu0 %v1098
      %1152 = vmatpush1.bf16.msra.mxu0 %v1097
      %1153 = vmatprep.subr.bf16.mxu0 %v1101
      %1154 = vmatpush1.bf16.msra.mxu0 %v1100
      %1155 = vmatprep.subr.bf16.mxu0 %v1104
      %1156 = vmatpush1.bf16.msra.mxu0 %v1103
      %1157 = vmatprep.subr.bf16.mxu0 %v1107
      %1158 = vmatpush1.bf16.msra.mxu0 %v1106
      %1159 = vmatprep.subr.bf16.mxu0 %v1110
      %1160 = vmatpush1.bf16.msra.mxu0 %v1109
      %1161 = vmatprep.subr.bf16.mxu0 %v1113
      %1162 = vmatpush1.bf16.msra.mxu0 %v1112
      %1163 = vmatprep.subr.bf16.mxu0 %v1116
      %1164 = vmatpush1.bf16.msra.mxu0 %v1115
      %1165 = vmatprep.subr.bf16.mxu0 %v1119
      %1166 = vmatpush1.bf16.msra.mxu0 %v1118
      %1167 = vmatprep.subr.bf16.mxu0 %v1122
      %1168 = vmatpush1.bf16.msra.mxu0 %v1121
      %1169 = vmatprep.mubr.bf16.mxu0 %v1134
      %1170 = vmatmul.mubr.bf16.gmra.mrb[0].mxu0 %v1133
      %v1171 = vpop.f32.mrb[0].mxu0
      %v1172 = vadd.f32 %v1128, %v1171
      %v1173 = vpop.f32.mrb[0].mxu0
      %v1174 = vadd.f32 %v1128, %v1173
      %v1175 = vpop.f32.mrb[0].mxu0
      %v1176 = vpop.f32.mrb[0].mxu0
      %1177 = vdwg.mxu0
      %1178 = vmatprep.subr.bf16.mxu0 0
      %1179 = vmatpush1.bf16.msra.mxu0 %v1078
      %1180 = vmatprep.subr.bf16.mxu0 0
      %1181 = vmatpush1.bf16.msra.mxu0 %v1081
      %1182 = vmatprep.subr.bf16.mxu0 0
      %1183 = vmatpush1.bf16.msra.mxu0 %v1084
      %1184 = vmatprep.subr.bf16.mxu0 0
      %1185 = vmatpush1.bf16.msra.mxu0 %v1087
      %1186 = vmatprep.subr.bf16.mxu0 0
      %1187 = vmatpush1.bf16.msra.mxu0 %v1090
      %1188 = vmatprep.subr.bf16.mxu0 0
      %1189 = vmatpush1.bf16.msra.mxu0 %v1093
      %1190 = vmatprep.subr.bf16.mxu0 0
      %1191 = vmatpush1.bf16.msra.mxu0 %v1096
      %1192 = vmatprep.subr.bf16.mxu0 0
      %1193 = vmatpush1.bf16.msra.mxu0 %v1099
      %1194 = vmatprep.subr.bf16.mxu0 0
      %1195 = vmatpush1.bf16.msra.mxu0 %v1102
      %1196 = vmatprep.subr.bf16.mxu0 0
      %1197 = vmatpush1.bf16.msra.mxu0 %v1105
      %1198 = vmatprep.subr.bf16.mxu0 0
      %1199 = vmatpush1.bf16.msra.mxu0 %v1108
      %1200 = vmatprep.subr.bf16.mxu0 0
      %1201 = vmatpush1.bf16.msra.mxu0 %v1111
      %1202 = vmatprep.subr.bf16.mxu0 0
      %1203 = vmatpush1.bf16.msra.mxu0 %v1114
      %1204 = vmatprep.subr.bf16.mxu0 0
      %1205 = vmatpush1.bf16.msra.mxu0 %v1117
      %1206 = vmatprep.subr.bf16.mxu0 0
      %1207 = vmatpush1.bf16.msra.mxu0 %v1120
      %1208 = vmatprep.subr.bf16.mxu0 0
      %1209 = vmatpush1.bf16.msra.mxu0 %v1123
      %1210 = vmatprep.mubr.bf16.mxu0 %v1134
      %1211 = vmatmul.mubr.bf16.gmra.mrb[0].mxu0 %v1133
      %v1212 = vpop.f32.mrb[0].mxu0
      %v1213 = vadd.f32 %v1128, %v1212
      %v1214 = vpop.f32.mrb[0].mxu0
      %v1215 = vpop.f32.mrb[0].mxu0
      %v1216 = vpop.f32.mrb[0].mxu0
      %1217 = vdwg.mxu0
      %vm1218 = vcmask 130048
      %1219 = vst.msk [vmem:[%s237] sm:$0xff] %vm1218, %v1172
      %1221 = vrot.lane.b32.xlu0 %v1172, 124
      %v1222 = vpop.permute.xlu0 %1221
      %vm1224 = vcmask 261248
      %1225 = vst.msk [vmem:[%s237] sm:$0xff] %vm1224, %v1222
      %1226 = vrot.lane.b32.xlu0 %v1172, 120
      %v1227 = vpop.permute.xlu0 %1226
      %vm1229 = vcmask 392448
      %1230 = vst.msk [vmem:[%s237] sm:$0xff] %vm1229, %v1227
      %1231 = vrot.lane.b32.xlu0 %v1172, 116
      %v1232 = vpop.permute.xlu0 %1231
      %vm1234 = vcmask 523648
      %1235 = vst.msk [vmem:[%s237] sm:$0xff] %vm1234, %v1232
      %1236 = vrot.lane.b32.xlu0 %v1172, 112
      %v1237 = vpop.permute.xlu0 %1236
      %vm1239 = vcmask 654848
      %1240 = vst.msk [vmem:[%s237] sm:$0xff] %vm1239, %v1237
      %1241 = vrot.lane.b32.xlu0 %v1172, 108
      %v1242 = vpop.permute.xlu0 %1241
      %vm1244 = vcmask 786048
      %1245 = vst.msk [vmem:[%s237] sm:$0xff] %vm1244, %v1242
      %1247 = vrot.lane.b32.xlu0 %v1172, 104
      %v1248 = vpop.permute.xlu0 %1247
      %1249 = vrot.lane.b32.xlu0 %v1174, 104
      %v1250 = vpop.permute.xlu0 %1249
      %v1251 = vsel %vm651, %v1248, %v1250
      %vm1253 = vcmask 917248
      %1254 = vst.msk [vmem:[%s237] sm:$0xff] %vm1253, %v1251
      %1255 = vrot.lane.b32.xlu0 %v1174, 100
      %v1256 = vpop.permute.xlu0 %1255
      %vm1258 = vcmask 1048448
      %1259 = vst.msk [vmem:[%s237] sm:$0xff] %vm1258, %v1256
      %1260 = vrot.lane.b32.xlu0 %v1174, 96
      %v1261 = vpop.permute.xlu0 %1260
      %1263 = vst.msk [vmem:[%s237 + $0x8] sm:$0xff] %vm1218, %v1261
      %1264 = vrot.lane.b32.xlu0 %v1174, 92
      %v1265 = vpop.permute.xlu0 %1264
      %1267 = vst.msk [vmem:[%s237 + $0x8] sm:$0xff] %vm1224, %v1265
      %1268 = vrot.lane.b32.xlu0 %v1174, 88
      %v1269 = vpop.permute.xlu0 %1268
      %1271 = vst.msk [vmem:[%s237 + $0x8] sm:$0xff] %vm1229, %v1269
      %1272 = vrot.lane.b32.xlu0 %v1174, 84
      %v1273 = vpop.permute.xlu0 %1272
      %1275 = vst.msk [vmem:[%s237 + $0x8] sm:$0xff] %vm1234, %v1273
      %1276 = vrot.lane.b32.xlu0 %v1174, 80
      %v1277 = vpop.permute.xlu0 %1276
      %1279 = vst.msk [vmem:[%s237 + $0x8] sm:$0xff] %vm1239, %v1277
      %1281 = vrot.lane.b32.xlu0 %v1213, 76
      %v1282 = vpop.permute.xlu0 %1281
      %1284 = vst.msk [vmem:[%s237 + $0x8] sm:$0xff] %vm1244, %v1282
      %1285 = vrot.lane.b32.xlu0 %v1213, 72
      %v1286 = vpop.permute.xlu0 %1285
      %1288 = vst.msk [vmem:[%s237 + $0x8] sm:$0xff] %vm1253, %v1286
      %1289 = vrot.lane.b32.xlu0 %v1213, 68
      %v1290 = vpop.permute.xlu0 %1289
      %1292 = vst.msk [vmem:[%s237 + $0x8] sm:$0xff] %vm1258, %v1290
      %v1293 = vld [vmem:[%s237] sm:$0xff]
      %v1294 = vld [vmem:[%s237 + $0x8] sm:$0xff]
      %v1295 = vadd.f32 %v1293, %v1294
      %1296 = vadd.xlane.f32.xlu0 %v1295
      %v1297 = vpop.xlane.xlu0 %1296
      %vm1298 = vcmask 7168
      %1299 = vst.msk [vmem:[%s241] sm:$0xff] %vm1298, %v1297
      %v1300 = vmul.f32 %v1293, %v1293
      %v1301 = vmul.f32 %v1294, %v1294
      %v1302 = vadd.f32 %v1300, %v1301
      %1303 = vadd.xlane.f32.xlu0 %v1302
      %v1304 = vpop.xlane.xlu0 %1303
      %1305 = vst.msk [vmem:[%s245] sm:$0xff] %vm1298, %v1304
      %p1306 = scmp.lt.s32.totalorder %s17, 1
      %s1307 = scalar_select %p1306, %s17, 1
      %s1308 = smul.addr %s1307, 2
      %s1309 = smul.addr %s1308, 8
      %s1310 = scalar_lea.vmem %s3, %s1309
      %p1311 = scmp.lt.s32.totalorder %s17, 1
      %s1312 = scalar_select %p1311, %s17, 1
      %s1313 = smul.addr %s1312, 8
      %s1314 = scalar_lea.vmem %s4, %s1313
      %p1315 = scmp.lt.s32.totalorder %s17, 1
      %s1316 = scalar_select %p1315, %s17, 1
      %s1317 = smul.addr %s1316, 8
      %s1318 = scalar_lea.vmem %s5, %s1317
      // Predicated region
      $region33: #{cbn2d.2} parent=31 // pred_check
        %p1319 = pneg %p103
      $region34: #{cbn2d.2} parent=31 // pred_check_branch
        %1321 = sbr.rel (%p1319) target = $region36
      $region35: #{cbn2d.2} parent=31 // pred_region
        _
      $region36: #{cbn2d.2} parent=31 // pred_fallthru
        _
      // Predicated region
      $region37: #{cbn2d.2} parent=31 // pred_check
        %p1322 = pneg %p129
      $region38: #{cbn2d.2} parent=31 // pred_check_branch
        %1324 = sbr.rel (%p1322) target = $region40
      $region39: #{cbn2d.2} parent=31 // pred_region
        _
      $region40: #{cbn2d.2} parent=31 // pred_fallthru
        _
      // Predicated region
      $region41: #{cbn2d.2} parent=31 // pred_check
        %p1325 = pneg %p155
      $region42: #{cbn2d.2} parent=31 // pred_check_branch
        %1327 = sbr.rel (%p1325) target = $region44
      $region43: #{cbn2d.2} parent=31 // pred_region
        _
      $region44: #{cbn2d.2} parent=31 // pred_fallthru
        _
    $region32: #{cbn2d.2} parent=5 // pred_fallthru
      _
    %p1328 = scmp.le.s32.totalorder 2, %s12
    // Predicated region
    $region45: #{cbn2d.2} parent=5 // pred_check
      %p1329 = pneg %p1328
    $region46: #{cbn2d.2} parent=5 // pred_check_branch
      %1331 = sbr.rel (%p1329) target = $region48
    $region47: #{cbn2d.2} parent=5 // pred_region
      %s1332 = ssub.s32 %s12, 2
      // Predicated region
      $region49: #{cbn2d.2} parent=47 // pred_check
        %p1333 = pneg %p109
      $region50: #{cbn2d.2} parent=47 // pred_check_branch
        %1335 = sbr.rel (%p1333) target = $region52
      $region51: #{cbn2d.2} parent=47 // pred_region
        %p1336 = scmp.lt.s32.totalorder %s18, 1
        %s1337 = scalar_select %p1336, %s18, 1
        %s1338 = smul.addr %s1337, 2
        %s1339 = smul.addr %s1338, 8
        %s1340 = scalar_lea.vmem %s3, %s1339
      $region52: #{cbn2d.2} parent=47 // pred_fallthru
        _
      // Predicated region
      $region53: #{cbn2d.2} parent=47 // pred_check
        %p1341 = pneg %p135
      $region54: #{cbn2d.2} parent=47 // pred_check_branch
        %1343 = sbr.rel (%p1341) target = $region56
      $region55: #{cbn2d.2} parent=47 // pred_region
        %p1344 = scmp.lt.s32.totalorder %s18, 1
        %s1345 = scalar_select %p1344, %s18, 1
        %s1346 = smul.addr %s1345, 8
        %s1347 = scalar_lea.vmem %s4, %s1346
      $region56: #{cbn2d.2} parent=47 // pred_fallthru
        _
      // Predicated region
      $region57: #{cbn2d.2} parent=47 // pred_check
        %p1348 = pneg %p161
      $region58: #{cbn2d.2} parent=47 // pred_check_branch
        %1350 = sbr.rel (%p1348) target = $region60
      $region59: #{cbn2d.2} parent=47 // pred_region
        %p1351 = scmp.lt.s32.totalorder %s18, 1
        %s1352 = scalar_select %p1351, %s18, 1
        %s1353 = smul.addr %s1352, 8
        %s1354 = scalar_lea.vmem %s5, %s1353
      $region60: #{cbn2d.2} parent=47 // pred_fallthru
        _
    $region48: #{cbn2d.2} parent=5 // pred_fallthru
      _
  $region6: #{cbn2d.2} parent=0 // loop_footer
    %s16 = sadd.s32 1, %s12
  $region7: #{cbn2d.2} parent=0 // loop_footer_branch
    %11 = sbr.rel target = $region3
  $region8: #{cbn2d.2} parent=0 // loop_exit
    _

</llo_original>
